<compile_context>
chip_gen: v5e
topology: v5e:2x2
jax: 0.10.0
libtpu: 0.0.40
codegen_flags: <defaults>
</compile_context>

<pallas_src>
import jax
import jax.numpy as jnp
from jax.experimental import pallas as pl
from jax.experimental.pallas import tpu as pltpu

EPS = 1e-5
MOMENTUM = 0.1


def _bn_kernel(x_ref, w_ref, b_ref, rm_ref, rv_ref, o_ref, nrm_ref, nrv_ref):
    # x_ref: (N, C, M) f32
    # w_ref / b_ref / rm_ref / rv_ref: (1, C, 1) f32
    # o_ref: (N, C, M) f32 ; nrm_ref / nrv_ref: (1, C, 1) f32
    x = x_ref[...]
    n, _, m = x.shape
    count = n * m
    inv_count = 1.0 / count

    # Per-channel batch statistics over (N, H*W); centered (two-pass) variance
    # for numerical stability (do NOT rewrite as E[x^2] - E[x]^2). x is
    # VMEM-resident so the second pass only costs vld/VALU, not HBM.
    mean = jnp.sum(x, axis=(0, 2), keepdims=True) * inv_count          # (1,C,1)
    xc = x - mean
    var = jnp.sum(xc * xc, axis=(0, 2), keepdims=True) * inv_count     # biased
    inv = jax.lax.rsqrt(var + EPS)                                     # (1,C,1)

    # Fold affine + mean into per-channel scale/shift. Broadcasts fuse into the
    # multiply/add below — no full-size temporaries are materialized.
    scale = inv * w_ref[...]                                           # (1,C,1)
    shift = b_ref[...] - mean * scale                                  # (1,C,1)
    o_ref[...] = x * scale + shift

    # Running-stat updates (PyTorch: running_var tracks the UNBIASED variance).
    denom = count - 1.0 if count > 1 else 1.0
    var_unbiased = var * (count / denom)
    nrm_ref[...] = (1.0 - MOMENTUM) * rm_ref[...] + MOMENTUM * mean
    nrv_ref[...] = (1.0 - MOMENTUM) * rv_ref[...] + MOMENTUM * var_unbiased


def batchnorm2d(x_nchw, weight, bias, running_mean, running_var):
    """x_nchw: (N, C, H, W) f32; weight/bias/running_*: (C,) f32.

    Returns (y, new_running_mean, new_running_var).
    """
    n, c, h, w = x_nchw.shape
    m = h * w

    # Pure reshapes only — no transpose / data movement in the wrapper.
    x3d = x_nchw.reshape(n, c, m)
    w3d = weight.reshape(1, c, 1)
    b3d = bias.reshape(1, c, 1)
    rm3d = running_mean.reshape(1, c, 1)
    rv3d = running_var.reshape(1, c, 1)

    cost = pl.CostEstimate(
        flops=8 * n * c * m,
        transcendentals=c,
        bytes_accessed=2 * 4 * n * c * m + 8 * 4 * c,
    )

    param_spec = pl.BlockSpec((1, c, 1), lambda i: (0, 0, 0))
    out3d, nrm3d, nrv3d = pl.pallas_call(
        _bn_kernel,
        out_shape=(
            jax.ShapeDtypeStruct((n, c, m), jnp.float32),
            jax.ShapeDtypeStruct((1, c, 1), jnp.float32),
            jax.ShapeDtypeStruct((1, c, 1), jnp.float32),
        ),
        grid=(1,),
        in_specs=[
            pl.BlockSpec((n, c, m), lambda i: (0, 0, 0)),
            param_spec,
            param_spec,
            param_spec,
            param_spec,
        ],
        out_specs=(
            pl.BlockSpec((n, c, m), lambda i: (0, 0, 0)),
            param_spec,
            param_spec,
        ),
        compiler_params=pltpu.CompilerParams(
            dimension_semantics=("arbitrary",),
        ),
        cost_estimate=cost,
    )(x3d, w3d, b3d, rm3d, rv3d)

    return (out3d.reshape(n, c, h, w),
            nrm3d.reshape(c),
            nrv3d.reshape(c))


if __name__ == "__main__":
    key = jax.random.PRNGKey(0)
    kx, kw, kb = jax.random.split(key, 3)

    N, C, H, W = 1, 244, 14, 14
    x = jax.random.normal(kx, (N, C, H, W), dtype=jnp.float32)
    # PyTorch default init is ones/zeros; use non-trivial deterministic values
    # to exercise the affine path.
    weight = 1.0 + 0.01 * jax.random.normal(kw, (C,), dtype=jnp.float32)
    bias = 0.01 * jax.random.normal(kb, (C,), dtype=jnp.float32)
    running_mean = jnp.zeros((C,), dtype=jnp.float32)   # PyTorch init
    running_var = jnp.ones((C,), dtype=jnp.float32)     # PyTorch init

    out, new_rm, new_rv = batchnorm2d(x, weight, bias, running_mean, running_var)
    out = jax.block_until_ready(out)
    new_rm = jax.block_until_ready(new_rm)
    new_rv = jax.block_until_ready(new_rv)

    # Reference in plain JAX (training-mode batch norm).
    mean = jnp.mean(x, axis=(0, 2, 3), keepdims=True)
    var = jnp.mean((x - mean) ** 2, axis=(0, 2, 3), keepdims=True)   # biased
    ref = (x - mean) / jnp.sqrt(var + EPS) * weight.reshape(1, C, 1, 1) \
        + bias.reshape(1, C, 1, 1)
    count = N * H * W
    var_unbiased = var.reshape(C) * (count / (count - 1.0))
    ref_rm = (1.0 - MOMENTUM) * running_mean + MOMENTUM * mean.reshape(C)
    ref_rv = (1.0 - MOMENTUM) * running_var + MOMENTUM * var_unbiased

    assert out.shape == (N, C, H, W)
    assert jnp.max(jnp.abs(out - ref)) < 1e-4
    assert jnp.max(jnp.abs(new_rm - ref_rm)) < 1e-5
    assert jnp.max(jnp.abs(new_rv - ref_rv)) < 1e-4

    print("KERNEL_OK")
</pallas_src>

<mosaic_0001>
module attributes {stable_mosaic.version = 11 : i64} {
  func.func @_bn_kernel(%arg0: i32, %arg1: memref<1x244x196xf32, #tpu.memory_space<vmem>>, %arg2: memref<1x244x1xf32, #tpu.memory_space<vmem>>, %arg3: memref<1x244x1xf32, #tpu.memory_space<vmem>>, %arg4: memref<1x244x1xf32, #tpu.memory_space<vmem>>, %arg5: memref<1x244x1xf32, #tpu.memory_space<vmem>>, %arg6: memref<1x244x196xf32, #tpu.memory_space<vmem>>, %arg7: memref<1x244x1xf32, #tpu.memory_space<vmem>>, %arg8: memref<1x244x1xf32, #tpu.memory_space<vmem>>) attributes {dimension_semantics = [#tpu.dimension_semantics<arbitrary>], iteration_bounds = array<i64: 1>, scalar_prefetch = 0 : i64, scratch_operands = 0 : i64, tpu.core_type = #tpu.core_type<tc>, window_params = [{pipeline_mode = #tpu.pipeline_mode<synchronous>, transform_indices = @transform_0, window_bounds = array<i64: 1, 244, 196>}, {pipeline_mode = #tpu.pipeline_mode<synchronous>, transform_indices = @transform_1, window_bounds = array<i64: 1, 244, 1>}, {pipeline_mode = #tpu.pipeline_mode<synchronous>, transform_indices = @transform_2, window_bounds = array<i64: 1, 244, 1>}, {pipeline_mode = #tpu.pipeline_mode<synchronous>, transform_indices = @transform_3, window_bounds = array<i64: 1, 244, 1>}, {pipeline_mode = #tpu.pipeline_mode<synchronous>, transform_indices = @transform_4, window_bounds = array<i64: 1, 244, 1>}, {pipeline_mode = #tpu.pipeline_mode<synchronous>, transform_indices = @transform_5, window_bounds = array<i64: 1, 244, 196>}, {pipeline_mode = #tpu.pipeline_mode<synchronous>, transform_indices = @transform_6, window_bounds = array<i64: 1, 244, 1>}, {pipeline_mode = #tpu.pipeline_mode<synchronous>, transform_indices = @transform_7, window_bounds = array<i64: 1, 244, 1>}]} {
    %c0 = arith.constant 0 : index
    %c0_0 = arith.constant 0 : index
    %c0_1 = arith.constant 0 : index
    %0 = vector.load %arg1[%c0, %c0_0, %c0_1] : memref<1x244x196xf32, #tpu.memory_space<vmem>>, vector<1x244x196xf32>
    %cst = arith.constant dense<0.000000e+00> : vector<244xf32>
    %1 = vector.multi_reduction <add>, %0, %cst [0, 2] : vector<1x244x196xf32> to vector<244xf32>
    %2 = vector.shape_cast %1 : vector<244xf32> to vector<1x244x1xf32>
    %cst_2 = arith.constant 0.00510204071 : f32
    %3 = vector.broadcast %cst_2 : f32 to vector<1x244x1xf32>
    %4 = arith.mulf %2, %3 : vector<1x244x1xf32>
    %5 = vector.broadcast %4 : vector<1x244x1xf32> to vector<1x244x196xf32>
    %6 = arith.subf %0, %5 : vector<1x244x196xf32>
    %7 = arith.mulf %6, %6 : vector<1x244x196xf32>
    %cst_3 = arith.constant dense<0.000000e+00> : vector<244xf32>
    %8 = vector.multi_reduction <add>, %7, %cst_3 [0, 2] : vector<1x244x196xf32> to vector<244xf32>
    %9 = vector.shape_cast %8 : vector<244xf32> to vector<1x244x1xf32>
    %cst_4 = arith.constant 0.00510204071 : f32
    %10 = vector.broadcast %cst_4 : f32 to vector<1x244x1xf32>
    %11 = arith.mulf %9, %10 : vector<1x244x1xf32>
    %cst_5 = arith.constant 9.99999974E-6 : f32
    %12 = vector.broadcast %cst_5 : f32 to vector<1x244x1xf32>
    %13 = arith.addf %11, %12 : vector<1x244x1xf32>
    %14 = math.rsqrt %13 : vector<1x244x1xf32>
    %c0_6 = arith.constant 0 : index
    %c0_7 = arith.constant 0 : index
    %c0_8 = arith.constant 0 : index
    %15 = vector.load %arg2[%c0_6, %c0_7, %c0_8] : memref<1x244x1xf32, #tpu.memory_space<vmem>>, vector<1x244x1xf32>
    %16 = arith.mulf %14, %15 : vector<1x244x1xf32>
    %c0_9 = arith.constant 0 : index
    %c0_10 = arith.constant 0 : index
    %c0_11 = arith.constant 0 : index
    %17 = vector.load %arg3[%c0_9, %c0_10, %c0_11] : memref<1x244x1xf32, #tpu.memory_space<vmem>>, vector<1x244x1xf32>
    %18 = arith.mulf %4, %16 : vector<1x244x1xf32>
    %19 = arith.subf %17, %18 : vector<1x244x1xf32>
    %20 = vector.broadcast %16 : vector<1x244x1xf32> to vector<1x244x196xf32>
    %21 = arith.mulf %0, %20 : vector<1x244x196xf32>
    %22 = vector.broadcast %19 : vector<1x244x1xf32> to vector<1x244x196xf32>
    %23 = arith.addf %21, %22 : vector<1x244x196xf32>
    %c0_12 = arith.constant 0 : index
    %c0_13 = arith.constant 0 : index
    %c0_14 = arith.constant 0 : index
    %24 = vector.load %arg6[%c0_12, %c0_13, %c0_14] : memref<1x244x196xf32, #tpu.memory_space<vmem>>, vector<1x244x196xf32>
    tpu.vector_store %arg6[%c0_12, %c0_13, %c0_14], %23 {strides = array<i32>} : memref<1x244x196xf32, #tpu.memory_space<vmem>>, vector<1x244x196xf32>,
    %cst_15 = arith.constant 1.00512826 : f32
    %25 = vector.broadcast %cst_15 : f32 to vector<1x244x1xf32>
    %26 = arith.mulf %11, %25 : vector<1x244x1xf32>
    %c0_16 = arith.constant 0 : index
    %c0_17 = arith.constant 0 : index
    %c0_18 = arith.constant 0 : index
    %27 = vector.load %arg4[%c0_16, %c0_17, %c0_18] : memref<1x244x1xf32, #tpu.memory_space<vmem>>, vector<1x244x1xf32>
    %cst_19 = arith.constant 0.899999976 : f32
    %28 = vector.broadcast %cst_19 : f32 to vector<1x244x1xf32>
    %29 = arith.mulf %28, %27 : vector<1x244x1xf32>
    %cst_20 = arith.constant 1.000000e-01 : f32
    %30 = vector.broadcast %cst_20 : f32 to vector<1x244x1xf32>
    %31 = arith.mulf %30, %4 : vector<1x244x1xf32>
    %32 = arith.addf %29, %31 : vector<1x244x1xf32>
    %c0_21 = arith.constant 0 : index
    %c0_22 = arith.constant 0 : index
    %c0_23 = arith.constant 0 : index
    %33 = vector.load %arg7[%c0_21, %c0_22, %c0_23] : memref<1x244x1xf32, #tpu.memory_space<vmem>>, vector<1x244x1xf32>
    tpu.vector_store %arg7[%c0_21, %c0_22, %c0_23], %32 {strides = array<i32>} : memref<1x244x1xf32, #tpu.memory_space<vmem>>, vector<1x244x1xf32>,
    %c0_24 = arith.constant 0 : index
    %c0_25 = arith.constant 0 : index
    %c0_26 = arith.constant 0 : index
    %34 = vector.load %arg5[%c0_24, %c0_25, %c0_26] : memref<1x244x1xf32, #tpu.memory_space<vmem>>, vector<1x244x1xf32>
    %cst_27 = arith.constant 0.899999976 : f32
    %35 = vector.broadcast %cst_27 : f32 to vector<1x244x1xf32>
    %36 = arith.mulf %35, %34 : vector<1x244x1xf32>
    %cst_28 = arith.constant 1.000000e-01 : f32
    %37 = vector.broadcast %cst_28 : f32 to vector<1x244x1xf32>
    %38 = arith.mulf %37, %26 : vector<1x244x1xf32>
    %39 = arith.addf %36, %38 : vector<1x244x1xf32>
    %c0_29 = arith.constant 0 : index
    %c0_30 = arith.constant 0 : index
    %c0_31 = arith.constant 0 : index
    %40 = vector.load %arg8[%c0_29, %c0_30, %c0_31] : memref<1x244x1xf32, #tpu.memory_space<vmem>>, vector<1x244x1xf32>
    tpu.vector_store %arg8[%c0_29, %c0_30, %c0_31], %39 {strides = array<i32>} : memref<1x244x1xf32, #tpu.memory_space<vmem>>, vector<1x244x1xf32>,
    return
  }
  func.func @transform_0(%arg0: i32) -> (i32, i32, i32) {
    %c0_i32 = arith.constant 0 : i32
    %c0_i32_0 = arith.constant 0 : i32
    %c0_i32_1 = arith.constant 0 : i32
    %c0_i32_2 = arith.constant 0 : i32
    return %c0_i32, %c0_i32_0, %c0_i32_1 : i32, i32, i32
  }
  func.func @transform_1(%arg0: i32) -> (i32, i32, i32) {
    %c0_i32 = arith.constant 0 : i32
    %c0_i32_0 = arith.constant 0 : i32
    %c0_i32_1 = arith.constant 0 : i32
    %c0_i32_2 = arith.constant 0 : i32
    return %c0_i32, %c0_i32_0, %c0_i32_1 : i32, i32, i32
  }
  func.func @transform_2(%arg0: i32) -> (i32, i32, i32) {
    %c0_i32 = arith.constant 0 : i32
    %c0_i32_0 = arith.constant 0 : i32
    %c0_i32_1 = arith.constant 0 : i32
    %c0_i32_2 = arith.constant 0 : i32
    return %c0_i32, %c0_i32_0, %c0_i32_1 : i32, i32, i32
  }
  func.func @transform_3(%arg0: i32) -> (i32, i32, i32) {
    %c0_i32 = arith.constant 0 : i32
    %c0_i32_0 = arith.constant 0 : i32
    %c0_i32_1 = arith.constant 0 : i32
    %c0_i32_2 = arith.constant 0 : i32
    return %c0_i32, %c0_i32_0, %c0_i32_1 : i32, i32, i32
  }
  func.func @transform_4(%arg0: i32) -> (i32, i32, i32) {
    %c0_i32 = arith.constant 0 : i32
    %c0_i32_0 = arith.constant 0 : i32
    %c0_i32_1 = arith.constant 0 : i32
    %c0_i32_2 = arith.constant 0 : i32
    return %c0_i32, %c0_i32_0, %c0_i32_1 : i32, i32, i32
  }
  func.func @transform_5(%arg0: i32) -> (i32, i32, i32) {
    %c0_i32 = arith.constant 0 : i32
    %c0_i32_0 = arith.constant 0 : i32
    %c0_i32_1 = arith.constant 0 : i32
    %c0_i32_2 = arith.constant 0 : i32
    return %c0_i32, %c0_i32_0, %c0_i32_1 : i32, i32, i32
  }
  func.func @transform_6(%arg0: i32) -> (i32, i32, i32) {
    %c0_i32 = arith.constant 0 : i32
    %c0_i32_0 = arith.constant 0 : i32
    %c0_i32_1 = arith.constant 0 : i32
    %c0_i32_2 = arith.constant 0 : i32
    return %c0_i32, %c0_i32_0, %c0_i32_1 : i32, i32, i32
  }
  func.func @transform_7(%arg0: i32) -> (i32, i32, i32) {
    %c0_i32 = arith.constant 0 : i32
    %c0_i32_0 = arith.constant 0 : i32
    %c0_i32_1 = arith.constant 0 : i32
    %c0_i32_2 = arith.constant 0 : i32
    return %c0_i32, %c0_i32_0, %c0_i32_1 : i32, i32, i32
  }
}

</mosaic_0001>

<llo_original>
// kernel: tpu_custom_call.1
$region0: #{tpu_custom_call.1}
  #allocation0 [shape = 'u32[]', space=smem, size = 0x4, offset = 0x4, fixed_abs, tag = 'smem constant byte address 0x4 - core index']
  #allocation1 [shape = 'u32[72,128]{1,0:T(1,128)}', space=vmem, size = 0x9000, scoped, tag = 'internal scratch']
  %s0 = inlined_call_operand.vmem [shape: f32[1,244,196], index: 0, kind: input, shape index: {}]
  %s1 = inlined_call_operand.vmem [shape: f32[1,244,1], index: 1, kind: input, shape index: {}]
  %s2 = inlined_call_operand.vmem [shape: f32[1,244,1], index: 2, kind: input, shape index: {}]
  %s3 = inlined_call_operand.vmem [shape: f32[1,244,1], index: 3, kind: input, shape index: {}]
  %s4 = inlined_call_operand.vmem [shape: f32[1,244,1], index: 4, kind: input, shape index: {}]
  %s5 = inlined_call_operand.vmem [shape: f32[1,244,196], index: 5, kind: output, shape index: {0}]
  %s6 = inlined_call_operand.vmem [shape: f32[1,244,1], index: 6, kind: output, shape index: {1}]
  %s7 = inlined_call_operand.vmem [shape: f32[1,244,1], index: 7, kind: output, shape index: {2}]
  %8 = xla_tuple %s5, %s6, %s7
  %s9 = sld [smem:[#allocation0]]
  $region46: #{tpu_custom_call.1} parent=0
    _
  %s11 = ssub.s32 1, %s9
  %s12 = scalar_select 0, %s11, %s9
  // Predicated region
  $region2: #{tpu_custom_call.1} parent=0 // pred_check
    _
  $region3: #{tpu_custom_call.1} parent=0 // pred_check_branch
    %14 = sbr.rel (0) target = $region5
  $region4: #{tpu_custom_call.1} parent=0 // pred_region
    _
  $region5: #{tpu_custom_call.1} parent=0 // pred_fallthru
    _
  // Predicated region
  $region6: #{tpu_custom_call.1} parent=0 // pred_check
    _
  $region7: #{tpu_custom_call.1} parent=0 // pred_check_branch
    %16 = sbr.rel (0) target = $region9
  $region8: #{tpu_custom_call.1} parent=0 // pred_region
    _
  $region9: #{tpu_custom_call.1} parent=0 // pred_fallthru
    _
  // Predicated region
  $region10: #{tpu_custom_call.1} parent=0 // pred_check
    _
  $region11: #{tpu_custom_call.1} parent=0 // pred_check_branch
    %18 = sbr.rel (0) target = $region13
  $region12: #{tpu_custom_call.1} parent=0 // pred_region
    _
  $region13: #{tpu_custom_call.1} parent=0 // pred_fallthru
    _
  // Predicated region
  $region14: #{tpu_custom_call.1} parent=0 // pred_check
    _
  $region15: #{tpu_custom_call.1} parent=0 // pred_check_branch
    %20 = sbr.rel (0) target = $region17
  $region16: #{tpu_custom_call.1} parent=0 // pred_region
    _
  $region17: #{tpu_custom_call.1} parent=0 // pred_fallthru
    _
  // Predicated region
  $region18: #{tpu_custom_call.1} parent=0 // pred_check
    _
  $region19: #{tpu_custom_call.1} parent=0 // pred_check_branch
    %22 = sbr.rel (0) target = $region21
  $region20: #{tpu_custom_call.1} parent=0 // pred_region
    _
  $region21: #{tpu_custom_call.1} parent=0 // pred_fallthru
    _
  %v23 = vld [vmem:[%s0] sm:$0xff]
  %v24 = vld [vmem:[%s0 + $0x8] sm:$0xff]
  %v25 = vld [vmem:[%s0 + $0x10] sm:$0xff]
  %v26 = vld [vmem:[%s0 + $0x18] sm:$0xff]
  %v27 = vld [vmem:[%s0 + $0x20] sm:$0xff]
  %v28 = vld [vmem:[%s0 + $0x28] sm:$0xff]
  %v29 = vld [vmem:[%s0 + $0x30] sm:$0xff]
  %v30 = vld [vmem:[%s0 + $0x38] sm:$0xff]
  %v31 = vld [vmem:[%s0 + $0x40] sm:$0xff]
  %v32 = vld [vmem:[%s0 + $0x48] sm:$0xff]
  %v33 = vld [vmem:[%s0 + $0x50] sm:$0xff]
  %v34 = vld [vmem:[%s0 + $0x58] sm:$0xff]
  %v35 = vld [vmem:[%s0 + $0x60] sm:$0xff]
  %v36 = vld [vmem:[%s0 + $0x68] sm:$0xff]
  %v37 = vld [vmem:[%s0 + $0x70] sm:$0xff]
  %v38 = vld [vmem:[%s0 + $0x78] sm:$0xff]
  %v39 = vld [vmem:[%s0 + $0x80] sm:$0xff]
  %v40 = vld [vmem:[%s0 + $0x88] sm:$0xff]
  %v41 = vld [vmem:[%s0 + $0x90] sm:$0xff]
  %v42 = vld [vmem:[%s0 + $0x98] sm:$0xff]
  %v43 = vld [vmem:[%s0 + $0xa0] sm:$0xff]
  %v44 = vld [vmem:[%s0 + $0xa8] sm:$0xff]
  %v45 = vld [vmem:[%s0 + $0xb0] sm:$0xff]
  %v46 = vld [vmem:[%s0 + $0xb8] sm:$0xff]
  %v47 = vld [vmem:[%s0 + $0xc0] sm:$0xff]
  %v48 = vld [vmem:[%s0 + $0xc8] sm:$0xff]
  %v49 = vld [vmem:[%s0 + $0xd0] sm:$0xff]
  %v50 = vld [vmem:[%s0 + $0xd8] sm:$0xff]
  %v51 = vld [vmem:[%s0 + $0xe0] sm:$0xff]
  %v52 = vld [vmem:[%s0 + $0xe8] sm:$0xff]
  %v53 = vld [vmem:[%s0 + $0xf0] sm:$0xff]
  %v54 = vld [vmem:[%s0 + $0xf8] sm:$0xff]
  %v55 = vld [vmem:[%s0 + $0x100] sm:$0xff]
  %v56 = vld [vmem:[%s0 + $0x108] sm:$0xff]
  %v57 = vld [vmem:[%s0 + $0x110] sm:$0xff]
  %v58 = vld [vmem:[%s0 + $0x118] sm:$0xff]
  %v59 = vld [vmem:[%s0 + $0x120] sm:$0xff]
  %v60 = vld [vmem:[%s0 + $0x128] sm:$0xff]
  %v61 = vld [vmem:[%s0 + $0x130] sm:$0xff]
  %v62 = vld [vmem:[%s0 + $0x138] sm:$0xff]
  %v63 = vld [vmem:[%s0 + $0x140] sm:$0xff]
  %v64 = vld [vmem:[%s0 + $0x148] sm:$0xff]
  %v65 = vld [vmem:[%s0 + $0x150] sm:$0xff]
  %v66 = vld [vmem:[%s0 + $0x158] sm:$0xff]
  %v67 = vld [vmem:[%s0 + $0x160] sm:$0xff]
  %v68 = vld [vmem:[%s0 + $0x168] sm:$0xff]
  %v69 = vld [vmem:[%s0 + $0x170] sm:$0xff]
  %v70 = vld [vmem:[%s0 + $0x178] sm:$0xff]
  %v71 = vld [vmem:[%s0 + $0x180] sm:$0xff]
  %v72 = vld [vmem:[%s0 + $0x188] sm:$0xff]
  %v73 = vld [vmem:[%s0 + $0x190] sm:$0xff]
  %v74 = vld [vmem:[%s0 + $0x198] sm:$0xff]
  %v75 = vld [vmem:[%s0 + $0x1a0] sm:$0xff]
  %v76 = vld [vmem:[%s0 + $0x1a8] sm:$0xff]
  %v77 = vld [vmem:[%s0 + $0x1b0] sm:$0xff]
  %v78 = vld [vmem:[%s0 + $0x1b8] sm:$0xff]
  %v79 = vld [vmem:[%s0 + $0x1c0] sm:$0xff]
  %v80 = vld [vmem:[%s0 + $0x1c8] sm:$0xff]
  %v81 = vld [vmem:[%s0 + $0x1d0] sm:$0xff]
  %v82 = vld [vmem:[%s0 + $0x1d8] sm:$0xff]
  %v83 = vld [vmem:[%s0 + $0x1e0] sm:$0xf]
  %v84 = vld [vmem:[%s0 + $0x1e8] sm:$0xf]
  %vm85 = vcmask 556032
  %v86 = vsel %vm85, %v24, 0.0
  %v87 = vadd.f32 %v23, %v86
  %88 = vadd.xlane.f32.xlu0 %v87
  %v89 = vpop.xlane.xlu0 %88
  %v90 = vsel %vm85, %v26, 0.0
  %v91 = vadd.f32 %v25, %v90
  %92 = vadd.xlane.f32.xlu0 %v91
  %v93 = vpop.xlane.xlu0 %92
  %v94 = vsel %vm85, %v28, 0.0
  %v95 = vadd.f32 %v27, %v94
  %96 = vadd.xlane.f32.xlu0 %v95
  %v97 = vpop.xlane.xlu0 %96
  %v98 = vsel %vm85, %v30, 0.0
  %v99 = vadd.f32 %v29, %v98
  %100 = vadd.xlane.f32.xlu0 %v99
  %v101 = vpop.xlane.xlu0 %100
  %v102 = vsel %vm85, %v32, 0.0
  %v103 = vadd.f32 %v31, %v102
  %104 = vadd.xlane.f32.xlu0 %v103
  %v105 = vpop.xlane.xlu0 %104
  %v106 = vsel %vm85, %v34, 0.0
  %v107 = vadd.f32 %v33, %v106
  %108 = vadd.xlane.f32.xlu0 %v107
  %v109 = vpop.xlane.xlu0 %108
  %v110 = vsel %vm85, %v36, 0.0
  %v111 = vadd.f32 %v35, %v110
  %112 = vadd.xlane.f32.xlu0 %v111
  %v113 = vpop.xlane.xlu0 %112
  %v114 = vsel %vm85, %v38, 0.0
  %v115 = vadd.f32 %v37, %v114
  %116 = vadd.xlane.f32.xlu0 %v115
  %v117 = vpop.xlane.xlu0 %116
  %v118 = vsel %vm85, %v40, 0.0
  %v119 = vadd.f32 %v39, %v118
  %120 = vadd.xlane.f32.xlu0 %v119
  %v121 = vpop.xlane.xlu0 %120
  %v122 = vsel %vm85, %v42, 0.0
  %v123 = vadd.f32 %v41, %v122
  %124 = vadd.xlane.f32.xlu0 %v123
  %v125 = vpop.xlane.xlu0 %124
  %v126 = vsel %vm85, %v44, 0.0
  %v127 = vadd.f32 %v43, %v126
  %128 = vadd.xlane.f32.xlu0 %v127
  %v129 = vpop.xlane.xlu0 %128
  %v130 = vsel %vm85, %v46, 0.0
  %v131 = vadd.f32 %v45, %v130
  %132 = vadd.xlane.f32.xlu0 %v131
  %v133 = vpop.xlane.xlu0 %132
  %v134 = vsel %vm85, %v48, 0.0
  %v135 = vadd.f32 %v47, %v134
  %136 = vadd.xlane.f32.xlu0 %v135
  %v137 = vpop.xlane.xlu0 %136
  %v138 = vsel %vm85, %v50, 0.0
  %v139 = vadd.f32 %v49, %v138
  %140 = vadd.xlane.f32.xlu0 %v139
  %v141 = vpop.xlane.xlu0 %140
  %v142 = vsel %vm85, %v52, 0.0
  %v143 = vadd.f32 %v51, %v142
  %144 = vadd.xlane.f32.xlu0 %v143
  %v145 = vpop.xlane.xlu0 %144
  %v146 = vsel %vm85, %v54, 0.0
  %v147 = vadd.f32 %v53, %v146
  %148 = vadd.xlane.f32.xlu0 %v147
  %v149 = vpop.xlane.xlu0 %148
  %v150 = vsel %vm85, %v56, 0.0
  %v151 = vadd.f32 %v55, %v150
  %152 = vadd.xlane.f32.xlu0 %v151
  %v153 = vpop.xlane.xlu0 %152
  %v154 = vsel %vm85, %v58, 0.0
  %v155 = vadd.f32 %v57, %v154
  %156 = vadd.xlane.f32.xlu0 %v155
  %v157 = vpop.xlane.xlu0 %156
  %v158 = vsel %vm85, %v60, 0.0
  %v159 = vadd.f32 %v59, %v158
  %160 = vadd.xlane.f32.xlu0 %v159
  %v161 = vpop.xlane.xlu0 %160
  %v162 = vsel %vm85, %v62, 0.0
  %v163 = vadd.f32 %v61, %v162
  %164 = vadd.xlane.f32.xlu0 %v163
  %v165 = vpop.xlane.xlu0 %164
  %v166 = vsel %vm85, %v64, 0.0
  %v167 = vadd.f32 %v63, %v166
  %168 = vadd.xlane.f32.xlu0 %v167
  %v169 = vpop.xlane.xlu0 %168
  %v170 = vsel %vm85, %v66, 0.0
  %v171 = vadd.f32 %v65, %v170
  %172 = vadd.xlane.f32.xlu0 %v171
  %v173 = vpop.xlane.xlu0 %172
  %v174 = vsel %vm85, %v68, 0.0
  %v175 = vadd.f32 %v67, %v174
  %176 = vadd.xlane.f32.xlu0 %v175
  %v177 = vpop.xlane.xlu0 %176
  %v178 = vsel %vm85, %v70, 0.0
  %v179 = vadd.f32 %v69, %v178
  %180 = vadd.xlane.f32.xlu0 %v179
  %v181 = vpop.xlane.xlu0 %180
  %v182 = vsel %vm85, %v72, 0.0
  %v183 = vadd.f32 %v71, %v182
  %184 = vadd.xlane.f32.xlu0 %v183
  %v185 = vpop.xlane.xlu0 %184
  %v186 = vsel %vm85, %v74, 0.0
  %v187 = vadd.f32 %v73, %v186
  %188 = vadd.xlane.f32.xlu0 %v187
  %v189 = vpop.xlane.xlu0 %188
  %v190 = vsel %vm85, %v76, 0.0
  %v191 = vadd.f32 %v75, %v190
  %192 = vadd.xlane.f32.xlu0 %v191
  %v193 = vpop.xlane.xlu0 %192
  %v194 = vsel %vm85, %v78, 0.0
  %v195 = vadd.f32 %v77, %v194
  %196 = vadd.xlane.f32.xlu0 %v195
  %v197 = vpop.xlane.xlu0 %196
  %v198 = vsel %vm85, %v80, 0.0
  %v199 = vadd.f32 %v79, %v198
  %200 = vadd.xlane.f32.xlu0 %v199
  %v201 = vpop.xlane.xlu0 %200
  %v202 = vsel %vm85, %v82, 0.0
  %v203 = vadd.f32 %v81, %v202
  %204 = vadd.xlane.f32.xlu0 %v203
  %v205 = vpop.xlane.xlu0 %204
  %vm206 = vcmask 1043456
  %v207 = vsel %vm206, %v83, 0.0
  %vm208 = vcmask 551936
  %v209 = vsel %vm208, %v84, 0.0
  %v210 = vadd.f32 %v207, %v209
  %211 = vadd.xlane.f32.xlu0 %v210
  %v212 = vpop.xlane.xlu0 %211
  %v213 = vmul.f32 %v89, 0.0051020407
  %v214 = vmul.f32 %v93, 0.0051020407
  %v215 = vmul.f32 %v97, 0.0051020407
  %v216 = vmul.f32 %v101, 0.0051020407
  %v217 = vmul.f32 %v105, 0.0051020407
  %v218 = vmul.f32 %v109, 0.0051020407
  %v219 = vmul.f32 %v113, 0.0051020407
  %v220 = vmul.f32 %v117, 0.0051020407
  %v221 = vmul.f32 %v121, 0.0051020407
  %v222 = vmul.f32 %v125, 0.0051020407
  %v223 = vmul.f32 %v129, 0.0051020407
  %v224 = vmul.f32 %v133, 0.0051020407
  %v225 = vmul.f32 %v137, 0.0051020407
  %v226 = vmul.f32 %v141, 0.0051020407
  %v227 = vmul.f32 %v145, 0.0051020407
  %v228 = vmul.f32 %v149, 0.0051020407
  %v229 = vmul.f32 %v153, 0.0051020407
  %v230 = vmul.f32 %v157, 0.0051020407
  %v231 = vmul.f32 %v161, 0.0051020407
  %v232 = vmul.f32 %v165, 0.0051020407
  %v233 = vmul.f32 %v169, 0.0051020407
  %v234 = vmul.f32 %v173, 0.0051020407
  %v235 = vmul.f32 %v177, 0.0051020407
  %v236 = vmul.f32 %v181, 0.0051020407
  %v237 = vmul.f32 %v185, 0.0051020407
  %v238 = vmul.f32 %v189, 0.0051020407
  %v239 = vmul.f32 %v193, 0.0051020407
  %v240 = vmul.f32 %v197, 0.0051020407
  %v241 = vmul.f32 %v201, 0.0051020407
  %v242 = vmul.f32 %v205, 0.0051020407
  %v243 = vmul.f32 %v212, 0.0051020407
  %v244 = vsub.f32 %v23, %v213
  %v245 = vsub.f32 %v24, %v213
  %v246 = vsub.f32 %v25, %v214
  %v247 = vsub.f32 %v26, %v214
  %v248 = vsub.f32 %v27, %v215
  %v249 = vsub.f32 %v28, %v215
  %v250 = vsub.f32 %v29, %v216
  %v251 = vsub.f32 %v30, %v216
  %v252 = vsub.f32 %v31, %v217
  %v253 = vsub.f32 %v32, %v217
  %v254 = vsub.f32 %v33, %v218
  %v255 = vsub.f32 %v34, %v218
  %v256 = vsub.f32 %v35, %v219
  %v257 = vsub.f32 %v36, %v219
  %v258 = vsub.f32 %v37, %v220
  %v259 = vsub.f32 %v38, %v220
  %v260 = vsub.f32 %v39, %v221
  %v261 = vsub.f32 %v40, %v221
  %v262 = vsub.f32 %v41, %v222
  %v263 = vsub.f32 %v42, %v222
  %v264 = vsub.f32 %v43, %v223
  %v265 = vsub.f32 %v44, %v223
  %v266 = vsub.f32 %v45, %v224
  %v267 = vsub.f32 %v46, %v224
  %v268 = vsub.f32 %v47, %v225
  %v269 = vsub.f32 %v48, %v225
  %v270 = vsub.f32 %v49, %v226
  %v271 = vsub.f32 %v50, %v226
  %v272 = vsub.f32 %v51, %v227
  %v273 = vsub.f32 %v52, %v227
  %v274 = vsub.f32 %v53, %v228
  %v275 = vsub.f32 %v54, %v228
  %v276 = vsub.f32 %v55, %v229
  %v277 = vsub.f32 %v56, %v229
  %v278 = vsub.f32 %v57, %v230
  %v279 = vsub.f32 %v58, %v230
  %v280 = vsub.f32 %v59, %v231
  %v281 = vsub.f32 %v60, %v231
  %v282 = vsub.f32 %v61, %v232
  %v283 = vsub.f32 %v62, %v232
  %v284 = vsub.f32 %v63, %v233
  %v285 = vsub.f32 %v64, %v233
  %v286 = vsub.f32 %v65, %v234
  %v287 = vsub.f32 %v66, %v234
  %v288 = vsub.f32 %v67, %v235
  %v289 = vsub.f32 %v68, %v235
  %v290 = vsub.f32 %v69, %v236
  %v291 = vsub.f32 %v70, %v236
  %v292 = vsub.f32 %v71, %v237
  %v293 = vsub.f32 %v72, %v237
  %v294 = vsub.f32 %v73, %v238
  %v295 = vsub.f32 %v74, %v238
  %v296 = vsub.f32 %v75, %v239
  %v297 = vsub.f32 %v76, %v239
  %v298 = vsub.f32 %v77, %v240
  %v299 = vsub.f32 %v78, %v240
  %v300 = vsub.f32 %v79, %v241
  %v301 = vsub.f32 %v80, %v241
  %v302 = vsub.f32 %v81, %v242
  %v303 = vsub.f32 %v82, %v242
  %v304 = vsub.f32 %v83, %v243
  %v305 = vsub.f32 %v84, %v243
  %v306 = vmul.f32 %v244, %v244
  %v307 = vmul.f32 %v245, %v245
  %v308 = vmul.f32 %v246, %v246
  %v309 = vmul.f32 %v247, %v247
  %v310 = vmul.f32 %v248, %v248
  %v311 = vmul.f32 %v249, %v249
  %v312 = vmul.f32 %v250, %v250
  %v313 = vmul.f32 %v251, %v251
  %v314 = vmul.f32 %v252, %v252
  %v315 = vmul.f32 %v253, %v253
  %v316 = vmul.f32 %v254, %v254
  %v317 = vmul.f32 %v255, %v255
  %v318 = vmul.f32 %v256, %v256
  %v319 = vmul.f32 %v257, %v257
  %v320 = vmul.f32 %v258, %v258
  %v321 = vmul.f32 %v259, %v259
  %v322 = vmul.f32 %v260, %v260
  %v323 = vmul.f32 %v261, %v261
  %v324 = vmul.f32 %v262, %v262
  %v325 = vmul.f32 %v263, %v263
  %v326 = vmul.f32 %v264, %v264
  %v327 = vmul.f32 %v265, %v265
  %v328 = vmul.f32 %v266, %v266
  %v329 = vmul.f32 %v267, %v267
  %v330 = vmul.f32 %v268, %v268
  %v331 = vmul.f32 %v269, %v269
  %v332 = vmul.f32 %v270, %v270
  %v333 = vmul.f32 %v271, %v271
  %v334 = vmul.f32 %v272, %v272
  %v335 = vmul.f32 %v273, %v273
  %v336 = vmul.f32 %v274, %v274
  %v337 = vmul.f32 %v275, %v275
  %v338 = vmul.f32 %v276, %v276
  %v339 = vmul.f32 %v277, %v277
  %v340 = vmul.f32 %v278, %v278
  %v341 = vmul.f32 %v279, %v279
  %v342 = vmul.f32 %v280, %v280
  %v343 = vmul.f32 %v281, %v281
  %v344 = vmul.f32 %v282, %v282
  %v345 = vmul.f32 %v283, %v283
  %v346 = vmul.f32 %v284, %v284
  %v347 = vmul.f32 %v285, %v285
  %v348 = vmul.f32 %v286, %v286
  %v349 = vmul.f32 %v287, %v287
  %v350 = vmul.f32 %v288, %v288
  %v351 = vmul.f32 %v289, %v289
  %v352 = vmul.f32 %v290, %v290
  %v353 = vmul.f32 %v291, %v291
  %v354 = vmul.f32 %v292, %v292
  %v355 = vmul.f32 %v293, %v293
  %v356 = vmul.f32 %v294, %v294
  %v357 = vmul.f32 %v295, %v295
  %v358 = vmul.f32 %v296, %v296
  %v359 = vmul.f32 %v297, %v297
  %v360 = vmul.f32 %v298, %v298
  %v361 = vmul.f32 %v299, %v299
  %v362 = vmul.f32 %v300, %v300
  %v363 = vmul.f32 %v301, %v301
  %v364 = vmul.f32 %v302, %v302
  %v365 = vmul.f32 %v303, %v303
  %v366 = vmul.f32 %v304, %v304
  %v367 = vmul.f32 %v305, %v305
  %v368 = vsel %vm85, %v307, 0.0
  %v369 = vadd.f32 %v306, %v368
  %370 = vadd.xlane.f32.xlu0 %v369
  %v371 = vpop.xlane.xlu0 %370
  %v372 = vsel %vm85, %v309, 0.0
  %v373 = vadd.f32 %v308, %v372
  %374 = vadd.xlane.f32.xlu0 %v373
  %v375 = vpop.xlane.xlu0 %374
  %v376 = vsel %vm85, %v311, 0.0
  %v377 = vadd.f32 %v310, %v376
  %378 = vadd.xlane.f32.xlu0 %v377
  %v379 = vpop.xlane.xlu0 %378
  %v380 = vsel %vm85, %v313, 0.0
  %v381 = vadd.f32 %v312, %v380
  %382 = vadd.xlane.f32.xlu0 %v381
  %v383 = vpop.xlane.xlu0 %382
  %v384 = vsel %vm85, %v315, 0.0
  %v385 = vadd.f32 %v314, %v384
  %386 = vadd.xlane.f32.xlu0 %v385
  %v387 = vpop.xlane.xlu0 %386
  %v388 = vsel %vm85, %v317, 0.0
  %v389 = vadd.f32 %v316, %v388
  %390 = vadd.xlane.f32.xlu0 %v389
  %v391 = vpop.xlane.xlu0 %390
  %v392 = vsel %vm85, %v319, 0.0
  %v393 = vadd.f32 %v318, %v392
  %394 = vadd.xlane.f32.xlu0 %v393
  %v395 = vpop.xlane.xlu0 %394
  %v396 = vsel %vm85, %v321, 0.0
  %v397 = vadd.f32 %v320, %v396
  %398 = vadd.xlane.f32.xlu0 %v397
  %v399 = vpop.xlane.xlu0 %398
  %v400 = vsel %vm85, %v323, 0.0
  %v401 = vadd.f32 %v322, %v400
  %402 = vadd.xlane.f32.xlu0 %v401
  %v403 = vpop.xlane.xlu0 %402
  %v404 = vsel %vm85, %v325, 0.0
  %v405 = vadd.f32 %v324, %v404
  %406 = vadd.xlane.f32.xlu0 %v405
  %v407 = vpop.xlane.xlu0 %406
  %v408 = vsel %vm85, %v327, 0.0
  %v409 = vadd.f32 %v326, %v408
  %410 = vadd.xlane.f32.xlu0 %v409
  %v411 = vpop.xlane.xlu0 %410
  %v412 = vsel %vm85, %v329, 0.0
  %v413 = vadd.f32 %v328, %v412
  %414 = vadd.xlane.f32.xlu0 %v413
  %v415 = vpop.xlane.xlu0 %414
  %v416 = vsel %vm85, %v331, 0.0
  %v417 = vadd.f32 %v330, %v416
  %418 = vadd.xlane.f32.xlu0 %v417
  %v419 = vpop.xlane.xlu0 %418
  %v420 = vsel %vm85, %v333, 0.0
  %v421 = vadd.f32 %v332, %v420
  %422 = vadd.xlane.f32.xlu0 %v421
  %v423 = vpop.xlane.xlu0 %422
  %v424 = vsel %vm85, %v335, 0.0
  %v425 = vadd.f32 %v334, %v424
  %426 = vadd.xlane.f32.xlu0 %v425
  %v427 = vpop.xlane.xlu0 %426
  %v428 = vsel %vm85, %v337, 0.0
  %v429 = vadd.f32 %v336, %v428
  %430 = vadd.xlane.f32.xlu0 %v429
  %v431 = vpop.xlane.xlu0 %430
  %v432 = vsel %vm85, %v339, 0.0
  %v433 = vadd.f32 %v338, %v432
  %434 = vadd.xlane.f32.xlu0 %v433
  %v435 = vpop.xlane.xlu0 %434
  %v436 = vsel %vm85, %v341, 0.0
  %v437 = vadd.f32 %v340, %v436
  %438 = vadd.xlane.f32.xlu0 %v437
  %v439 = vpop.xlane.xlu0 %438
  %v440 = vsel %vm85, %v343, 0.0
  %v441 = vadd.f32 %v342, %v440
  %442 = vadd.xlane.f32.xlu0 %v441
  %v443 = vpop.xlane.xlu0 %442
  %v444 = vsel %vm85, %v345, 0.0
  %v445 = vadd.f32 %v344, %v444
  %446 = vadd.xlane.f32.xlu0 %v445
  %v447 = vpop.xlane.xlu0 %446
  %v448 = vsel %vm85, %v347, 0.0
  %v449 = vadd.f32 %v346, %v448
  %450 = vadd.xlane.f32.xlu0 %v449
  %v451 = vpop.xlane.xlu0 %450
  %v452 = vsel %vm85, %v349, 0.0
  %v453 = vadd.f32 %v348, %v452
  %454 = vadd.xlane.f32.xlu0 %v453
  %v455 = vpop.xlane.xlu0 %454
  %v456 = vsel %vm85, %v351, 0.0
  %v457 = vadd.f32 %v350, %v456
  %458 = vadd.xlane.f32.xlu0 %v457
  %v459 = vpop.xlane.xlu0 %458
  %v460 = vsel %vm85, %v353, 0.0
  %v461 = vadd.f32 %v352, %v460
  %462 = vadd.xlane.f32.xlu0 %v461
  %v463 = vpop.xlane.xlu0 %462
  %v464 = vsel %vm85, %v355, 0.0
  %v465 = vadd.f32 %v354, %v464
  %466 = vadd.xlane.f32.xlu0 %v465
  %v467 = vpop.xlane.xlu0 %466
  %v468 = vsel %vm85, %v357, 0.0
  %v469 = vadd.f32 %v356, %v468
  %470 = vadd.xlane.f32.xlu0 %v469
  %v471 = vpop.xlane.xlu0 %470
  %v472 = vsel %vm85, %v359, 0.0
  %v473 = vadd.f32 %v358, %v472
  %474 = vadd.xlane.f32.xlu0 %v473
  %v475 = vpop.xlane.xlu0 %474
  %v476 = vsel %vm85, %v361, 0.0
  %v477 = vadd.f32 %v360, %v476
  %478 = vadd.xlane.f32.xlu0 %v477
  %v479 = vpop.xlane.xlu0 %478
  %v480 = vsel %vm85, %v363, 0.0
  %v481 = vadd.f32 %v362, %v480
  %482 = vadd.xlane.f32.xlu0 %v481
  %v483 = vpop.xlane.xlu0 %482
  %v484 = vsel %vm85, %v365, 0.0
  %v485 = vadd.f32 %v364, %v484
  %486 = vadd.xlane.f32.xlu0 %v485
  %v487 = vpop.xlane.xlu0 %486
  %v488 = vsel %vm206, %v366, 0.0
  %v489 = vsel %vm208, %v367, 0.0
  %v490 = vadd.f32 %v488, %v489
  %491 = vadd.xlane.f32.xlu0 %v490
  %v492 = vpop.xlane.xlu0 %491
  %v493 = vmul.f32 %v371, 0.0051020407
  %v494 = vmul.f32 %v375, 0.0051020407
  %v495 = vmul.f32 %v379, 0.0051020407
  %v496 = vmul.f32 %v383, 0.0051020407
  %v497 = vmul.f32 %v387, 0.0051020407
  %v498 = vmul.f32 %v391, 0.0051020407
  %v499 = vmul.f32 %v395, 0.0051020407
  %v500 = vmul.f32 %v399, 0.0051020407
  %v501 = vmul.f32 %v403, 0.0051020407
  %v502 = vmul.f32 %v407, 0.0051020407
  %v503 = vmul.f32 %v411, 0.0051020407
  %v504 = vmul.f32 %v415, 0.0051020407
  %v505 = vmul.f32 %v419, 0.0051020407
  %v506 = vmul.f32 %v423, 0.0051020407
  %v507 = vmul.f32 %v427, 0.0051020407
  %v508 = vmul.f32 %v431, 0.0051020407
  %v509 = vmul.f32 %v435, 0.0051020407
  %v510 = vmul.f32 %v439, 0.0051020407
  %v511 = vmul.f32 %v443, 0.0051020407
  %v512 = vmul.f32 %v447, 0.0051020407
  %v513 = vmul.f32 %v451, 0.0051020407
  %v514 = vmul.f32 %v455, 0.0051020407
  %v515 = vmul.f32 %v459, 0.0051020407
  %v516 = vmul.f32 %v463, 0.0051020407
  %v517 = vmul.f32 %v467, 0.0051020407
  %v518 = vmul.f32 %v471, 0.0051020407
  %v519 = vmul.f32 %v475, 0.0051020407
  %v520 = vmul.f32 %v479, 0.0051020407
  %v521 = vmul.f32 %v483, 0.0051020407
  %v522 = vmul.f32 %v487, 0.0051020407
  %v523 = vmul.f32 %v492, 0.0051020407
  %v524 = vadd.f32 %v493, 1e-05
  %v525 = vadd.f32 %v494, 1e-05
  %v526 = vadd.f32 %v495, 1e-05
  %v527 = vadd.f32 %v496, 1e-05
  %v528 = vadd.f32 %v497, 1e-05
  %v529 = vadd.f32 %v498, 1e-05
  %v530 = vadd.f32 %v499, 1e-05
  %v531 = vadd.f32 %v500, 1e-05
  %v532 = vadd.f32 %v501, 1e-05
  %v533 = vadd.f32 %v502, 1e-05
  %v534 = vadd.f32 %v503, 1e-05
  %v535 = vadd.f32 %v504, 1e-05
  %v536 = vadd.f32 %v505, 1e-05
  %v537 = vadd.f32 %v506, 1e-05
  %v538 = vadd.f32 %v507, 1e-05
  %v539 = vadd.f32 %v508, 1e-05
  %v540 = vadd.f32 %v509, 1e-05
  %v541 = vadd.f32 %v510, 1e-05
  %v542 = vadd.f32 %v511, 1e-05
  %v543 = vadd.f32 %v512, 1e-05
  %v544 = vadd.f32 %v513, 1e-05
  %v545 = vadd.f32 %v514, 1e-05
  %v546 = vadd.f32 %v515, 1e-05
  %v547 = vadd.f32 %v516, 1e-05
  %v548 = vadd.f32 %v517, 1e-05
  %v549 = vadd.f32 %v518, 1e-05
  %v550 = vadd.f32 %v519, 1e-05
  %v551 = vadd.f32 %v520, 1e-05
  %v552 = vadd.f32 %v521, 1e-05
  %v553 = vadd.f32 %v522, 1e-05
  %v554 = vadd.f32 %v523, 1e-05
  %v555 = vrsqrt.pop %v524
  %v556 = vmul.f32 %v555, %v524
  %v557 = vmul.f32 %v556, %v555
  %v558 = vmul.f32 0.5, %v557
  %v559 = vsub.f32 1.5, %v558
  %v560 = vmul.f32 %v555, %v559
  %vm561 = vweird.f32 %v524
  %vm562 = vweird.f32 %v555
  %vm563 = vmor %vm561, %vm562
  %v564 = vsel %vm563, %v555, %v560
  %v565 = vrsqrt.pop %v525
  %v566 = vmul.f32 %v565, %v525
  %v567 = vmul.f32 %v566, %v565
  %v568 = vmul.f32 0.5, %v567
  %v569 = vsub.f32 1.5, %v568
  %v570 = vmul.f32 %v565, %v569
  %vm571 = vweird.f32 %v525
  %vm572 = vweird.f32 %v565
  %vm573 = vmor %vm571, %vm572
  %v574 = vsel %vm573, %v565, %v570
  %v575 = vrsqrt.pop %v526
  %v576 = vmul.f32 %v575, %v526
  %v577 = vmul.f32 %v576, %v575
  %v578 = vmul.f32 0.5, %v577
  %v579 = vsub.f32 1.5, %v578
  %v580 = vmul.f32 %v575, %v579
  %vm581 = vweird.f32 %v526
  %vm582 = vweird.f32 %v575
  %vm583 = vmor %vm581, %vm582
  %v584 = vsel %vm583, %v575, %v580
  %v585 = vrsqrt.pop %v527
  %v586 = vmul.f32 %v585, %v527
  %v587 = vmul.f32 %v586, %v585
  %v588 = vmul.f32 0.5, %v587
  %v589 = vsub.f32 1.5, %v588
  %v590 = vmul.f32 %v585, %v589
  %vm591 = vweird.f32 %v527
  %vm592 = vweird.f32 %v585
  %vm593 = vmor %vm591, %vm592
  %v594 = vsel %vm593, %v585, %v590
  %v595 = vrsqrt.pop %v528
  %v596 = vmul.f32 %v595, %v528
  %v597 = vmul.f32 %v596, %v595
  %v598 = vmul.f32 0.5, %v597
  %v599 = vsub.f32 1.5, %v598
  %v600 = vmul.f32 %v595, %v599
  %vm601 = vweird.f32 %v528
  %vm602 = vweird.f32 %v595
  %vm603 = vmor %vm601, %vm602
  %v604 = vsel %vm603, %v595, %v600
  %v605 = vrsqrt.pop %v529
  %v606 = vmul.f32 %v605, %v529
  %v607 = vmul.f32 %v606, %v605
  %v608 = vmul.f32 0.5, %v607
  %v609 = vsub.f32 1.5, %v608
  %v610 = vmul.f32 %v605, %v609
  %vm611 = vweird.f32 %v529
  %vm612 = vweird.f32 %v605
  %vm613 = vmor %vm611, %vm612
  %v614 = vsel %vm613, %v605, %v610
  %v615 = vrsqrt.pop %v530
  %v616 = vmul.f32 %v615, %v530
  %v617 = vmul.f32 %v616, %v615
  %v618 = vmul.f32 0.5, %v617
  %v619 = vsub.f32 1.5, %v618
  %v620 = vmul.f32 %v615, %v619
  %vm621 = vweird.f32 %v530
  %vm622 = vweird.f32 %v615
  %vm623 = vmor %vm621, %vm622
  %v624 = vsel %vm623, %v615, %v620
  %v625 = vrsqrt.pop %v531
  %v626 = vmul.f32 %v625, %v531
  %v627 = vmul.f32 %v626, %v625
  %v628 = vmul.f32 0.5, %v627
  %v629 = vsub.f32 1.5, %v628
  %v630 = vmul.f32 %v625, %v629
  %vm631 = vweird.f32 %v531
  %vm632 = vweird.f32 %v625
  %vm633 = vmor %vm631, %vm632
  %v634 = vsel %vm633, %v625, %v630
  %v635 = vrsqrt.pop %v532
  %v636 = vmul.f32 %v635, %v532
  %v637 = vmul.f32 %v636, %v635
  %v638 = vmul.f32 0.5, %v637
  %v639 = vsub.f32 1.5, %v638
  %v640 = vmul.f32 %v635, %v639
  %vm641 = vweird.f32 %v532
  %vm642 = vweird.f32 %v635
  %vm643 = vmor %vm641, %vm642
  %v644 = vsel %vm643, %v635, %v640
  %v645 = vrsqrt.pop %v533
  %v646 = vmul.f32 %v645, %v533
  %v647 = vmul.f32 %v646, %v645
  %v648 = vmul.f32 0.5, %v647
  %v649 = vsub.f32 1.5, %v648
  %v650 = vmul.f32 %v645, %v649
  %vm651 = vweird.f32 %v533
  %vm652 = vweird.f32 %v645
  %vm653 = vmor %vm651, %vm652
  %v654 = vsel %vm653, %v645, %v650
  %v655 = vrsqrt.pop %v534
  %v656 = vmul.f32 %v655, %v534
  %v657 = vmul.f32 %v656, %v655
  %v658 = vmul.f32 0.5, %v657
  %v659 = vsub.f32 1.5, %v658
  %v660 = vmul.f32 %v655, %v659
  %vm661 = vweird.f32 %v534
  %vm662 = vweird.f32 %v655
  %vm663 = vmor %vm661, %vm662
  %v664 = vsel %vm663, %v655, %v660
  %v665 = vrsqrt.pop %v535
  %v666 = vmul.f32 %v665, %v535
  %v667 = vmul.f32 %v666, %v665
  %v668 = vmul.f32 0.5, %v667
  %v669 = vsub.f32 1.5, %v668
  %v670 = vmul.f32 %v665, %v669
  %vm671 = vweird.f32 %v535
  %vm672 = vweird.f32 %v665
  %vm673 = vmor %vm671, %vm672
  %v674 = vsel %vm673, %v665, %v670
  %v675 = vrsqrt.pop %v536
  %v676 = vmul.f32 %v675, %v536
  %v677 = vmul.f32 %v676, %v675
  %v678 = vmul.f32 0.5, %v677
  %v679 = vsub.f32 1.5, %v678
  %v680 = vmul.f32 %v675, %v679
  %vm681 = vweird.f32 %v536
  %vm682 = vweird.f32 %v675
  %vm683 = vmor %vm681, %vm682
  %v684 = vsel %vm683, %v675, %v680
  %v685 = vrsqrt.pop %v537
  %v686 = vmul.f32 %v685, %v537
  %v687 = vmul.f32 %v686, %v685
  %v688 = vmul.f32 0.5, %v687
  %v689 = vsub.f32 1.5, %v688
  %v690 = vmul.f32 %v685, %v689
  %vm691 = vweird.f32 %v537
  %vm692 = vweird.f32 %v685
  %vm693 = vmor %vm691, %vm692
  %v694 = vsel %vm693, %v685, %v690
  %v695 = vrsqrt.pop %v538
  %v696 = vmul.f32 %v695, %v538
  %v697 = vmul.f32 %v696, %v695
  %v698 = vmul.f32 0.5, %v697
  %v699 = vsub.f32 1.5, %v698
  %v700 = vmul.f32 %v695, %v699
  %vm701 = vweird.f32 %v538
  %vm702 = vweird.f32 %v695
  %vm703 = vmor %vm701, %vm702
  %v704 = vsel %vm703, %v695, %v700
  %v705 = vrsqrt.pop %v539
  %v706 = vmul.f32 %v705, %v539
  %v707 = vmul.f32 %v706, %v705
  %v708 = vmul.f32 0.5, %v707
  %v709 = vsub.f32 1.5, %v708
  %v710 = vmul.f32 %v705, %v709
  %vm711 = vweird.f32 %v539
  %vm712 = vweird.f32 %v705
  %vm713 = vmor %vm711, %vm712
  %v714 = vsel %vm713, %v705, %v710
  %v715 = vrsqrt.pop %v540
  %v716 = vmul.f32 %v715, %v540
  %v717 = vmul.f32 %v716, %v715
  %v718 = vmul.f32 0.5, %v717
  %v719 = vsub.f32 1.5, %v718
  %v720 = vmul.f32 %v715, %v719
  %vm721 = vweird.f32 %v540
  %vm722 = vweird.f32 %v715
  %vm723 = vmor %vm721, %vm722
  %v724 = vsel %vm723, %v715, %v720
  %v725 = vrsqrt.pop %v541
  %v726 = vmul.f32 %v725, %v541
  %v727 = vmul.f32 %v726, %v725
  %v728 = vmul.f32 0.5, %v727
  %v729 = vsub.f32 1.5, %v728
  %v730 = vmul.f32 %v725, %v729
  %vm731 = vweird.f32 %v541
  %vm732 = vweird.f32 %v725
  %vm733 = vmor %vm731, %vm732
  %v734 = vsel %vm733, %v725, %v730
  %v735 = vrsqrt.pop %v542
  %v736 = vmul.f32 %v735, %v542
  %v737 = vmul.f32 %v736, %v735
  %v738 = vmul.f32 0.5, %v737
  %v739 = vsub.f32 1.5, %v738
  %v740 = vmul.f32 %v735, %v739
  %vm741 = vweird.f32 %v542
  %vm742 = vweird.f32 %v735
  %vm743 = vmor %vm741, %vm742
  %v744 = vsel %vm743, %v735, %v740
  %v745 = vrsqrt.pop %v543
  %v746 = vmul.f32 %v745, %v543
  %v747 = vmul.f32 %v746, %v745
  %v748 = vmul.f32 0.5, %v747
  %v749 = vsub.f32 1.5, %v748
  %v750 = vmul.f32 %v745, %v749
  %vm751 = vweird.f32 %v543
  %vm752 = vweird.f32 %v745
  %vm753 = vmor %vm751, %vm752
  %v754 = vsel %vm753, %v745, %v750
  %v755 = vrsqrt.pop %v544
  %v756 = vmul.f32 %v755, %v544
  %v757 = vmul.f32 %v756, %v755
  %v758 = vmul.f32 0.5, %v757
  %v759 = vsub.f32 1.5, %v758
  %v760 = vmul.f32 %v755, %v759
  %vm761 = vweird.f32 %v544
  %vm762 = vweird.f32 %v755
  %vm763 = vmor %vm761, %vm762
  %v764 = vsel %vm763, %v755, %v760
  %v765 = vrsqrt.pop %v545
  %v766 = vmul.f32 %v765, %v545
  %v767 = vmul.f32 %v766, %v765
  %v768 = vmul.f32 0.5, %v767
  %v769 = vsub.f32 1.5, %v768
  %v770 = vmul.f32 %v765, %v769
  %vm771 = vweird.f32 %v545
  %vm772 = vweird.f32 %v765
  %vm773 = vmor %vm771, %vm772
  %v774 = vsel %vm773, %v765, %v770
  %v775 = vrsqrt.pop %v546
  %v776 = vmul.f32 %v775, %v546
  %v777 = vmul.f32 %v776, %v775
  %v778 = vmul.f32 0.5, %v777
  %v779 = vsub.f32 1.5, %v778
  %v780 = vmul.f32 %v775, %v779
  %vm781 = vweird.f32 %v546
  %vm782 = vweird.f32 %v775
  %vm783 = vmor %vm781, %vm782
  %v784 = vsel %vm783, %v775, %v780
  %v785 = vrsqrt.pop %v547
  %v786 = vmul.f32 %v785, %v547
  %v787 = vmul.f32 %v786, %v785
  %v788 = vmul.f32 0.5, %v787
  %v789 = vsub.f32 1.5, %v788
  %v790 = vmul.f32 %v785, %v789
  %vm791 = vweird.f32 %v547
  %vm792 = vweird.f32 %v785
  %vm793 = vmor %vm791, %vm792
  %v794 = vsel %vm793, %v785, %v790
  %v795 = vrsqrt.pop %v548
  %v796 = vmul.f32 %v795, %v548
  %v797 = vmul.f32 %v796, %v795
  %v798 = vmul.f32 0.5, %v797
  %v799 = vsub.f32 1.5, %v798
  %v800 = vmul.f32 %v795, %v799
  %vm801 = vweird.f32 %v548
  %vm802 = vweird.f32 %v795
  %vm803 = vmor %vm801, %vm802
  %v804 = vsel %vm803, %v795, %v800
  %v805 = vrsqrt.pop %v549
  %v806 = vmul.f32 %v805, %v549
  %v807 = vmul.f32 %v806, %v805
  %v808 = vmul.f32 0.5, %v807
  %v809 = vsub.f32 1.5, %v808
  %v810 = vmul.f32 %v805, %v809
  %vm811 = vweird.f32 %v549
  %vm812 = vweird.f32 %v805
  %vm813 = vmor %vm811, %vm812
  %v814 = vsel %vm813, %v805, %v810
  %v815 = vrsqrt.pop %v550
  %v816 = vmul.f32 %v815, %v550
  %v817 = vmul.f32 %v816, %v815
  %v818 = vmul.f32 0.5, %v817
  %v819 = vsub.f32 1.5, %v818
  %v820 = vmul.f32 %v815, %v819
  %vm821 = vweird.f32 %v550
  %vm822 = vweird.f32 %v815
  %vm823 = vmor %vm821, %vm822
  %v824 = vsel %vm823, %v815, %v820
  %v825 = vrsqrt.pop %v551
  %v826 = vmul.f32 %v825, %v551
  %v827 = vmul.f32 %v826, %v825
  %v828 = vmul.f32 0.5, %v827
  %v829 = vsub.f32 1.5, %v828
  %v830 = vmul.f32 %v825, %v829
  %vm831 = vweird.f32 %v551
  %vm832 = vweird.f32 %v825
  %vm833 = vmor %vm831, %vm832
  %v834 = vsel %vm833, %v825, %v830
  %v835 = vrsqrt.pop %v552
  %v836 = vmul.f32 %v835, %v552
  %v837 = vmul.f32 %v836, %v835
  %v838 = vmul.f32 0.5, %v837
  %v839 = vsub.f32 1.5, %v838
  %v840 = vmul.f32 %v835, %v839
  %vm841 = vweird.f32 %v552
  %vm842 = vweird.f32 %v835
  %vm843 = vmor %vm841, %vm842
  %v844 = vsel %vm843, %v835, %v840
  %v845 = vrsqrt.pop %v553
  %v846 = vmul.f32 %v845, %v553
  %v847 = vmul.f32 %v846, %v845
  %v848 = vmul.f32 0.5, %v847
  %v849 = vsub.f32 1.5, %v848
  %v850 = vmul.f32 %v845, %v849
  %vm851 = vweird.f32 %v553
  %vm852 = vweird.f32 %v845
  %vm853 = vmor %vm851, %vm852
  %v854 = vsel %vm853, %v845, %v850
  %v855 = vrsqrt.pop %v554
  %v856 = vmul.f32 %v855, %v554
  %v857 = vmul.f32 %v856, %v855
  %v858 = vmul.f32 0.5, %v857
  %v859 = vsub.f32 1.5, %v858
  %v860 = vmul.f32 %v855, %v859
  %vm861 = vweird.f32 %v554
  %vm862 = vweird.f32 %v855
  %vm863 = vmor %vm861, %vm862
  %v864 = vsel %vm863, %v855, %v860
  %v865 = vld [vmem:[%s1] sm:$0xff]
  %v866 = vld [vmem:[%s1 + $0x8] sm:$0xff]
  %v867 = vld [vmem:[%s1 + $0x10] sm:$0xff]
  %v868 = vld [vmem:[%s1 + $0x18] sm:$0xff]
  %v869 = vld [vmem:[%s1 + $0x20] sm:$0xff]
  %v870 = vld [vmem:[%s1 + $0x28] sm:$0xff]
  %v871 = vld [vmem:[%s1 + $0x30] sm:$0xff]
  %v872 = vld [vmem:[%s1 + $0x38] sm:$0xff]
  %v873 = vld [vmem:[%s1 + $0x40] sm:$0xff]
  %v874 = vld [vmem:[%s1 + $0x48] sm:$0xff]
  %v875 = vld [vmem:[%s1 + $0x50] sm:$0xff]
  %v876 = vld [vmem:[%s1 + $0x58] sm:$0xff]
  %v877 = vld [vmem:[%s1 + $0x60] sm:$0xff]
  %v878 = vld [vmem:[%s1 + $0x68] sm:$0xff]
  %v879 = vld [vmem:[%s1 + $0x70] sm:$0xff]
  %v880 = vld [vmem:[%s1 + $0x78] sm:$0xff]
  %v881 = vld [vmem:[%s1 + $0x80] sm:$0xff]
  %v882 = vld [vmem:[%s1 + $0x88] sm:$0xff]
  %v883 = vld [vmem:[%s1 + $0x90] sm:$0xff]
  %v884 = vld [vmem:[%s1 + $0x98] sm:$0xff]
  %v885 = vld [vmem:[%s1 + $0xa0] sm:$0xff]
  %v886 = vld [vmem:[%s1 + $0xa8] sm:$0xff]
  %v887 = vld [vmem:[%s1 + $0xb0] sm:$0xff]
  %v888 = vld [vmem:[%s1 + $0xb8] sm:$0xff]
  %v889 = vld [vmem:[%s1 + $0xc0] sm:$0xff]
  %v890 = vld [vmem:[%s1 + $0xc8] sm:$0xff]
  %v891 = vld [vmem:[%s1 + $0xd0] sm:$0xff]
  %v892 = vld [vmem:[%s1 + $0xd8] sm:$0xff]
  %v893 = vld [vmem:[%s1 + $0xe0] sm:$0xff]
  %v894 = vld [vmem:[%s1 + $0xe8] sm:$0xff]
  %v895 = vld [vmem:[%s1 + $0xf0] sm:$0xf]
  %v896 = vmul.f32 %v564, %v865
  %v897 = vmul.f32 %v574, %v866
  %v898 = vmul.f32 %v584, %v867
  %v899 = vmul.f32 %v594, %v868
  %v900 = vmul.f32 %v604, %v869
  %v901 = vmul.f32 %v614, %v870
  %v902 = vmul.f32 %v624, %v871
  %v903 = vmul.f32 %v634, %v872
  %v904 = vmul.f32 %v644, %v873
  %v905 = vmul.f32 %v654, %v874
  %v906 = vmul.f32 %v664, %v875
  %v907 = vmul.f32 %v674, %v876
  %v908 = vmul.f32 %v684, %v877
  %v909 = vmul.f32 %v694, %v878
  %v910 = vmul.f32 %v704, %v879
  %v911 = vmul.f32 %v714, %v880
  %v912 = vmul.f32 %v724, %v881
  %v913 = vmul.f32 %v734, %v882
  %v914 = vmul.f32 %v744, %v883
  %v915 = vmul.f32 %v754, %v884
  %v916 = vmul.f32 %v764, %v885
  %v917 = vmul.f32 %v774, %v886
  %v918 = vmul.f32 %v784, %v887
  %v919 = vmul.f32 %v794, %v888
  %v920 = vmul.f32 %v804, %v889
  %v921 = vmul.f32 %v814, %v890
  %v922 = vmul.f32 %v824, %v891
  %v923 = vmul.f32 %v834, %v892
  %v924 = vmul.f32 %v844, %v893
  %v925 = vmul.f32 %v854, %v894
  %v926 = vmul.f32 %v864, %v895
  %v927 = vld [vmem:[%s2] sm:$0xff]
  %v928 = vld [vmem:[%s2 + $0x8] sm:$0xff]
  %v929 = vld [vmem:[%s2 + $0x10] sm:$0xff]
  %v930 = vld [vmem:[%s2 + $0x18] sm:$0xff]
  %v931 = vld [vmem:[%s2 + $0x20] sm:$0xff]
  %v932 = vld [vmem:[%s2 + $0x28] sm:$0xff]
  %v933 = vld [vmem:[%s2 + $0x30] sm:$0xff]
  %v934 = vld [vmem:[%s2 + $0x38] sm:$0xff]
  %v935 = vld [vmem:[%s2 + $0x40] sm:$0xff]
  %v936 = vld [vmem:[%s2 + $0x48] sm:$0xff]
  %v937 = vld [vmem:[%s2 + $0x50] sm:$0xff]
  %v938 = vld [vmem:[%s2 + $0x58] sm:$0xff]
  %v939 = vld [vmem:[%s2 + $0x60] sm:$0xff]
  %v940 = vld [vmem:[%s2 + $0x68] sm:$0xff]
  %v941 = vld [vmem:[%s2 + $0x70] sm:$0xff]
  %v942 = vld [vmem:[%s2 + $0x78] sm:$0xff]
  %v943 = vld [vmem:[%s2 + $0x80] sm:$0xff]
  %v944 = vld [vmem:[%s2 + $0x88] sm:$0xff]
  %v945 = vld [vmem:[%s2 + $0x90] sm:$0xff]
  %v946 = vld [vmem:[%s2 + $0x98] sm:$0xff]
  %v947 = vld [vmem:[%s2 + $0xa0] sm:$0xff]
  %v948 = vld [vmem:[%s2 + $0xa8] sm:$0xff]
  %v949 = vld [vmem:[%s2 + $0xb0] sm:$0xff]
  %v950 = vld [vmem:[%s2 + $0xb8] sm:$0xff]
  %v951 = vld [vmem:[%s2 + $0xc0] sm:$0xff]
  %v952 = vld [vmem:[%s2 + $0xc8] sm:$0xff]
  %v953 = vld [vmem:[%s2 + $0xd0] sm:$0xff]
  %v954 = vld [vmem:[%s2 + $0xd8] sm:$0xff]
  %v955 = vld [vmem:[%s2 + $0xe0] sm:$0xff]
  %v956 = vld [vmem:[%s2 + $0xe8] sm:$0xff]
  %v957 = vld [vmem:[%s2 + $0xf0] sm:$0xf]
  %v958 = vmul.f32 %v213, %v896
  %v959 = vmul.f32 %v214, %v897
  %v960 = vmul.f32 %v215, %v898
  %v961 = vmul.f32 %v216, %v899
  %v962 = vmul.f32 %v217, %v900
  %v963 = vmul.f32 %v218, %v901
  %v964 = vmul.f32 %v219, %v902
  %v965 = vmul.f32 %v220, %v903
  %v966 = vmul.f32 %v221, %v904
  %v967 = vmul.f32 %v222, %v905
  %v968 = vmul.f32 %v223, %v906
  %v969 = vmul.f32 %v224, %v907
  %v970 = vmul.f32 %v225, %v908
  %v971 = vmul.f32 %v226, %v909
  %v972 = vmul.f32 %v227, %v910
  %v973 = vmul.f32 %v228, %v911
  %v974 = vmul.f32 %v229, %v912
  %v975 = vmul.f32 %v230, %v913
  %v976 = vmul.f32 %v231, %v914
  %v977 = vmul.f32 %v232, %v915
  %v978 = vmul.f32 %v233, %v916
  %v979 = vmul.f32 %v234, %v917
  %v980 = vmul.f32 %v235, %v918
  %v981 = vmul.f32 %v236, %v919
  %v982 = vmul.f32 %v237, %v920
  %v983 = vmul.f32 %v238, %v921
  %v984 = vmul.f32 %v239, %v922
  %v985 = vmul.f32 %v240, %v923
  %v986 = vmul.f32 %v241, %v924
  %v987 = vmul.f32 %v242, %v925
  %v988 = vmul.f32 %v243, %v926
  %v989 = vsub.f32 %v927, %v958
  %v990 = vsub.f32 %v928, %v959
  %v991 = vsub.f32 %v929, %v960
  %v992 = vsub.f32 %v930, %v961
  %v993 = vsub.f32 %v931, %v962
  %v994 = vsub.f32 %v932, %v963
  %v995 = vsub.f32 %v933, %v964
  %v996 = vsub.f32 %v934, %v965
  %v997 = vsub.f32 %v935, %v966
  %v998 = vsub.f32 %v936, %v967
  %v999 = vsub.f32 %v937, %v968
  %v1000 = vsub.f32 %v938, %v969
  %v1001 = vsub.f32 %v939, %v970
  %v1002 = vsub.f32 %v940, %v971
  %v1003 = vsub.f32 %v941, %v972
  %v1004 = vsub.f32 %v942, %v973
  %v1005 = vsub.f32 %v943, %v974
  %v1006 = vsub.f32 %v944, %v975
  %v1007 = vsub.f32 %v945, %v976
  %v1008 = vsub.f32 %v946, %v977
  %v1009 = vsub.f32 %v947, %v978
  %v1010 = vsub.f32 %v948, %v979
  %v1011 = vsub.f32 %v949, %v980
  %v1012 = vsub.f32 %v950, %v981
  %v1013 = vsub.f32 %v951, %v982
  %v1014 = vsub.f32 %v952, %v983
  %v1015 = vsub.f32 %v953, %v984
  %v1016 = vsub.f32 %v954, %v985
  %v1017 = vsub.f32 %v955, %v986
  %v1018 = vsub.f32 %v956, %v987
  %v1019 = vsub.f32 %v957, %v988
  %1021 = vset.pattern.permute.xlu0 0
  %1022 = vperm.xlu0 %1021, %v896
  %v1023 = vpop.permute.xlu0 %1022
  %1026 = vset.pattern.permute.xlu0 0
  %1027 = vperm.xlu0 %1026, %v897
  %v1028 = vpop.permute.xlu0 %1027
  %1031 = vset.pattern.permute.xlu0 0
  %1032 = vperm.xlu0 %1031, %v898
  %v1033 = vpop.permute.xlu0 %1032
  %1036 = vset.pattern.permute.xlu0 0
  %1037 = vperm.xlu0 %1036, %v899
  %v1038 = vpop.permute.xlu0 %1037
  %1041 = vset.pattern.permute.xlu0 0
  %1042 = vperm.xlu0 %1041, %v900
  %v1043 = vpop.permute.xlu0 %1042
  %1046 = vset.pattern.permute.xlu0 0
  %1047 = vperm.xlu0 %1046, %v901
  %v1048 = vpop.permute.xlu0 %1047
  %1051 = vset.pattern.permute.xlu0 0
  %1052 = vperm.xlu0 %1051, %v902
  %v1053 = vpop.permute.xlu0 %1052
  %1056 = vset.pattern.permute.xlu0 0
  %1057 = vperm.xlu0 %1056, %v903
  %v1058 = vpop.permute.xlu0 %1057
  %1061 = vset.pattern.permute.xlu0 0
  %1062 = vperm.xlu0 %1061, %v904
  %v1063 = vpop.permute.xlu0 %1062
  %1066 = vset.pattern.permute.xlu0 0
  %1067 = vperm.xlu0 %1066, %v905
  %v1068 = vpop.permute.xlu0 %1067
  %1071 = vset.pattern.permute.xlu0 0
  %1072 = vperm.xlu0 %1071, %v906
  %v1073 = vpop.permute.xlu0 %1072
  %1076 = vset.pattern.permute.xlu0 0
  %1077 = vperm.xlu0 %1076, %v907
  %v1078 = vpop.permute.xlu0 %1077
  %1081 = vset.pattern.permute.xlu0 0
  %1082 = vperm.xlu0 %1081, %v908
  %v1083 = vpop.permute.xlu0 %1082
  %1086 = vset.pattern.permute.xlu0 0
  %1087 = vperm.xlu0 %1086, %v909
  %v1088 = vpop.permute.xlu0 %1087
  %1091 = vset.pattern.permute.xlu0 0
  %1092 = vperm.xlu0 %1091, %v910
  %v1093 = vpop.permute.xlu0 %1092
  %1096 = vset.pattern.permute.xlu0 0
  %1097 = vperm.xlu0 %1096, %v911
  %v1098 = vpop.permute.xlu0 %1097
  %1101 = vset.pattern.permute.xlu0 0
  %1102 = vperm.xlu0 %1101, %v912
  %v1103 = vpop.permute.xlu0 %1102
  %1106 = vset.pattern.permute.xlu0 0
  %1107 = vperm.xlu0 %1106, %v913
  %v1108 = vpop.permute.xlu0 %1107
  %1111 = vset.pattern.permute.xlu0 0
  %1112 = vperm.xlu0 %1111, %v914
  %v1113 = vpop.permute.xlu0 %1112
  %1116 = vset.pattern.permute.xlu0 0
  %1117 = vperm.xlu0 %1116, %v915
  %v1118 = vpop.permute.xlu0 %1117
  %1121 = vset.pattern.permute.xlu0 0
  %1122 = vperm.xlu0 %1121, %v916
  %v1123 = vpop.permute.xlu0 %1122
  %1126 = vset.pattern.permute.xlu0 0
  %1127 = vperm.xlu0 %1126, %v917
  %v1128 = vpop.permute.xlu0 %1127
  %1131 = vset.pattern.permute.xlu0 0
  %1132 = vperm.xlu0 %1131, %v918
  %v1133 = vpop.permute.xlu0 %1132
  %1136 = vset.pattern.permute.xlu0 0
  %1137 = vperm.xlu0 %1136, %v919
  %v1138 = vpop.permute.xlu0 %1137
  %1141 = vset.pattern.permute.xlu0 0
  %1142 = vperm.xlu0 %1141, %v920
  %v1143 = vpop.permute.xlu0 %1142
  %1146 = vset.pattern.permute.xlu0 0
  %1147 = vperm.xlu0 %1146, %v921
  %v1148 = vpop.permute.xlu0 %1147
  %1151 = vset.pattern.permute.xlu0 0
  %1152 = vperm.xlu0 %1151, %v922
  %v1153 = vpop.permute.xlu0 %1152
  %1156 = vset.pattern.permute.xlu0 0
  %1157 = vperm.xlu0 %1156, %v923
  %v1158 = vpop.permute.xlu0 %1157
  %1161 = vset.pattern.permute.xlu0 0
  %1162 = vperm.xlu0 %1161, %v924
  %v1163 = vpop.permute.xlu0 %1162
  %1166 = vset.pattern.permute.xlu0 0
  %1167 = vperm.xlu0 %1166, %v925
  %v1168 = vpop.permute.xlu0 %1167
  %1171 = vset.pattern.permute.xlu0 0
  %1172 = vperm.xlu0 %1171, %v926
  %v1173 = vpop.permute.xlu0 %1172
  %v1175 = vmul.f32 %v23, %v1023
  %v1176 = vmul.f32 %v24, %v1023
  %v1177 = vmul.f32 %v25, %v1028
  %v1178 = vmul.f32 %v26, %v1028
  %v1179 = vmul.f32 %v27, %v1033
  %v1180 = vmul.f32 %v28, %v1033
  %v1181 = vmul.f32 %v29, %v1038
  %v1182 = vmul.f32 %v30, %v1038
  %v1183 = vmul.f32 %v31, %v1043
  %v1184 = vmul.f32 %v32, %v1043
  %v1185 = vmul.f32 %v33, %v1048
  %v1186 = vmul.f32 %v34, %v1048
  %v1187 = vmul.f32 %v35, %v1053
  %v1188 = vmul.f32 %v36, %v1053
  %v1189 = vmul.f32 %v37, %v1058
  %v1190 = vmul.f32 %v38, %v1058
  %v1191 = vmul.f32 %v39, %v1063
  %v1192 = vmul.f32 %v40, %v1063
  %v1193 = vmul.f32 %v41, %v1068
  %v1194 = vmul.f32 %v42, %v1068
  %v1195 = vmul.f32 %v43, %v1073
  %v1196 = vmul.f32 %v44, %v1073
  %v1197 = vmul.f32 %v45, %v1078
  %v1198 = vmul.f32 %v46, %v1078
  %v1199 = vmul.f32 %v47, %v1083
  %v1200 = vmul.f32 %v48, %v1083
  %v1201 = vmul.f32 %v49, %v1088
  %v1202 = vmul.f32 %v50, %v1088
  %v1203 = vmul.f32 %v51, %v1093
  %v1204 = vmul.f32 %v52, %v1093
  %v1205 = vmul.f32 %v53, %v1098
  %v1206 = vmul.f32 %v54, %v1098
  %v1207 = vmul.f32 %v55, %v1103
  %v1208 = vmul.f32 %v56, %v1103
  %v1209 = vmul.f32 %v57, %v1108
  %v1210 = vmul.f32 %v58, %v1108
  %v1211 = vmul.f32 %v59, %v1113
  %v1212 = vmul.f32 %v60, %v1113
  %v1213 = vmul.f32 %v61, %v1118
  %v1214 = vmul.f32 %v62, %v1118
  %v1215 = vmul.f32 %v63, %v1123
  %v1216 = vmul.f32 %v64, %v1123
  %v1217 = vmul.f32 %v65, %v1128
  %v1218 = vmul.f32 %v66, %v1128
  %v1219 = vmul.f32 %v67, %v1133
  %v1220 = vmul.f32 %v68, %v1133
  %v1221 = vmul.f32 %v69, %v1138
  %v1222 = vmul.f32 %v70, %v1138
  %v1223 = vmul.f32 %v71, %v1143
  %v1224 = vmul.f32 %v72, %v1143
  %v1225 = vmul.f32 %v73, %v1148
  %v1226 = vmul.f32 %v74, %v1148
  %v1227 = vmul.f32 %v75, %v1153
  %v1228 = vmul.f32 %v76, %v1153
  %v1229 = vmul.f32 %v77, %v1158
  %v1230 = vmul.f32 %v78, %v1158
  %v1231 = vmul.f32 %v79, %v1163
  %v1232 = vmul.f32 %v80, %v1163
  %v1233 = vmul.f32 %v81, %v1168
  %v1234 = vmul.f32 %v82, %v1168
  %v1235 = vmul.f32 %v83, %v1173
  %v1236 = vmul.f32 %v84, %v1173
  %1238 = vset.pattern.permute.xlu0 0
  %1239 = vperm.xlu0 %1238, %v989
  %v1240 = vpop.permute.xlu0 %1239
  %1243 = vset.pattern.permute.xlu0 0
  %1244 = vperm.xlu0 %1243, %v990
  %v1245 = vpop.permute.xlu0 %1244
  %1248 = vset.pattern.permute.xlu0 0
  %1249 = vperm.xlu0 %1248, %v991
  %v1250 = vpop.permute.xlu0 %1249
  %1253 = vset.pattern.permute.xlu0 0
  %1254 = vperm.xlu0 %1253, %v992
  %v1255 = vpop.permute.xlu0 %1254
  %1258 = vset.pattern.permute.xlu0 0
  %1259 = vperm.xlu0 %1258, %v993
  %v1260 = vpop.permute.xlu0 %1259
  %1263 = vset.pattern.permute.xlu0 0
  %1264 = vperm.xlu0 %1263, %v994
  %v1265 = vpop.permute.xlu0 %1264
  %1268 = vset.pattern.permute.xlu0 0
  %1269 = vperm.xlu0 %1268, %v995
  %v1270 = vpop.permute.xlu0 %1269
  %1273 = vset.pattern.permute.xlu0 0
  %1274 = vperm.xlu0 %1273, %v996
  %v1275 = vpop.permute.xlu0 %1274
  %1278 = vset.pattern.permute.xlu0 0
  %1279 = vperm.xlu0 %1278, %v997
  %v1280 = vpop.permute.xlu0 %1279
  %1283 = vset.pattern.permute.xlu0 0
  %1284 = vperm.xlu0 %1283, %v998
  %v1285 = vpop.permute.xlu0 %1284
  %1288 = vset.pattern.permute.xlu0 0
  %1289 = vperm.xlu0 %1288, %v999
  %v1290 = vpop.permute.xlu0 %1289
  %1293 = vset.pattern.permute.xlu0 0
  %1294 = vperm.xlu0 %1293, %v1000
  %v1295 = vpop.permute.xlu0 %1294
  %1298 = vset.pattern.permute.xlu0 0
  %1299 = vperm.xlu0 %1298, %v1001
  %v1300 = vpop.permute.xlu0 %1299
  %1303 = vset.pattern.permute.xlu0 0
  %1304 = vperm.xlu0 %1303, %v1002
  %v1305 = vpop.permute.xlu0 %1304
  %1308 = vset.pattern.permute.xlu0 0
  %1309 = vperm.xlu0 %1308, %v1003
  %v1310 = vpop.permute.xlu0 %1309
  %1313 = vset.pattern.permute.xlu0 0
  %1314 = vperm.xlu0 %1313, %v1004
  %v1315 = vpop.permute.xlu0 %1314
  %1318 = vset.pattern.permute.xlu0 0
  %1319 = vperm.xlu0 %1318, %v1005
  %v1320 = vpop.permute.xlu0 %1319
  %1323 = vset.pattern.permute.xlu0 0
  %1324 = vperm.xlu0 %1323, %v1006
  %v1325 = vpop.permute.xlu0 %1324
  %1328 = vset.pattern.permute.xlu0 0
  %1329 = vperm.xlu0 %1328, %v1007
  %v1330 = vpop.permute.xlu0 %1329
  %1333 = vset.pattern.permute.xlu0 0
  %1334 = vperm.xlu0 %1333, %v1008
  %v1335 = vpop.permute.xlu0 %1334
  %1338 = vset.pattern.permute.xlu0 0
  %1339 = vperm.xlu0 %1338, %v1009
  %v1340 = vpop.permute.xlu0 %1339
  %1343 = vset.pattern.permute.xlu0 0
  %1344 = vperm.xlu0 %1343, %v1010
  %v1345 = vpop.permute.xlu0 %1344
  %1348 = vset.pattern.permute.xlu0 0
  %1349 = vperm.xlu0 %1348, %v1011
  %v1350 = vpop.permute.xlu0 %1349
  %1353 = vset.pattern.permute.xlu0 0
  %1354 = vperm.xlu0 %1353, %v1012
  %v1355 = vpop.permute.xlu0 %1354
  %1358 = vset.pattern.permute.xlu0 0
  %1359 = vperm.xlu0 %1358, %v1013
  %v1360 = vpop.permute.xlu0 %1359
  %1363 = vset.pattern.permute.xlu0 0
  %1364 = vperm.xlu0 %1363, %v1014
  %v1365 = vpop.permute.xlu0 %1364
  %1368 = vset.pattern.permute.xlu0 0
  %1369 = vperm.xlu0 %1368, %v1015
  %v1370 = vpop.permute.xlu0 %1369
  %1373 = vset.pattern.permute.xlu0 0
  %1374 = vperm.xlu0 %1373, %v1016
  %v1375 = vpop.permute.xlu0 %1374
  %1378 = vset.pattern.permute.xlu0 0
  %1379 = vperm.xlu0 %1378, %v1017
  %v1380 = vpop.permute.xlu0 %1379
  %1383 = vset.pattern.permute.xlu0 0
  %1384 = vperm.xlu0 %1383, %v1018
  %v1385 = vpop.permute.xlu0 %1384
  %1388 = vset.pattern.permute.xlu0 0
  %1389 = vperm.xlu0 %1388, %v1019
  %v1390 = vpop.permute.xlu0 %1389
  %v1392 = vadd.f32 %v1175, %v1240
  %v1393 = vadd.f32 %v1176, %v1240
  %v1394 = vadd.f32 %v1177, %v1245
  %v1395 = vadd.f32 %v1178, %v1245
  %v1396 = vadd.f32 %v1179, %v1250
  %v1397 = vadd.f32 %v1180, %v1250
  %v1398 = vadd.f32 %v1181, %v1255
  %v1399 = vadd.f32 %v1182, %v1255
  %v1400 = vadd.f32 %v1183, %v1260
  %v1401 = vadd.f32 %v1184, %v1260
  %v1402 = vadd.f32 %v1185, %v1265
  %v1403 = vadd.f32 %v1186, %v1265
  %v1404 = vadd.f32 %v1187, %v1270
  %v1405 = vadd.f32 %v1188, %v1270
  %v1406 = vadd.f32 %v1189, %v1275
  %v1407 = vadd.f32 %v1190, %v1275
  %v1408 = vadd.f32 %v1191, %v1280
  %v1409 = vadd.f32 %v1192, %v1280
  %v1410 = vadd.f32 %v1193, %v1285
  %v1411 = vadd.f32 %v1194, %v1285
  %v1412 = vadd.f32 %v1195, %v1290
  %v1413 = vadd.f32 %v1196, %v1290
  %v1414 = vadd.f32 %v1197, %v1295
  %v1415 = vadd.f32 %v1198, %v1295
  %v1416 = vadd.f32 %v1199, %v1300
  %v1417 = vadd.f32 %v1200, %v1300
  %v1418 = vadd.f32 %v1201, %v1305
  %v1419 = vadd.f32 %v1202, %v1305
  %v1420 = vadd.f32 %v1203, %v1310
  %v1421 = vadd.f32 %v1204, %v1310
  %v1422 = vadd.f32 %v1205, %v1315
  %v1423 = vadd.f32 %v1206, %v1315
  %v1424 = vadd.f32 %v1207, %v1320
  %v1425 = vadd.f32 %v1208, %v1320
  %v1426 = vadd.f32 %v1209, %v1325
  %v1427 = vadd.f32 %v1210, %v1325
  %v1428 = vadd.f32 %v1211, %v1330
  %v1429 = vadd.f32 %v1212, %v1330
  %v1430 = vadd.f32 %v1213, %v1335
  %v1431 = vadd.f32 %v1214, %v1335
  %v1432 = vadd.f32 %v1215, %v1340
  %v1433 = vadd.f32 %v1216, %v1340
  %v1434 = vadd.f32 %v1217, %v1345
  %v1435 = vadd.f32 %v1218, %v1345
  %v1436 = vadd.f32 %v1219, %v1350
  %v1437 = vadd.f32 %v1220, %v1350
  %v1438 = vadd.f32 %v1221, %v1355
  %v1439 = vadd.f32 %v1222, %v1355
  %v1440 = vadd.f32 %v1223, %v1360
  %v1441 = vadd.f32 %v1224, %v1360
  %v1442 = vadd.f32 %v1225, %v1365
  %v1443 = vadd.f32 %v1226, %v1365
  %v1444 = vadd.f32 %v1227, %v1370
  %v1445 = vadd.f32 %v1228, %v1370
  %v1446 = vadd.f32 %v1229, %v1375
  %v1447 = vadd.f32 %v1230, %v1375
  %v1448 = vadd.f32 %v1231, %v1380
  %v1449 = vadd.f32 %v1232, %v1380
  %v1450 = vadd.f32 %v1233, %v1385
  %v1451 = vadd.f32 %v1234, %v1385
  %v1452 = vadd.f32 %v1235, %v1390
  %v1453 = vadd.f32 %v1236, %v1390
  %1454 = vst [vmem:[%s5] sm:$0xff] %v1392
  %1455 = vst.msk [vmem:[%s5 + $0x8] sm:$0xff] %vm85, %v1393
  %1456 = vst [vmem:[%s5 + $0x10] sm:$0xff] %v1394
  %1457 = vst.msk [vmem:[%s5 + $0x18] sm:$0xff] %vm85, %v1395
  %1458 = vst [vmem:[%s5 + $0x20] sm:$0xff] %v1396
  %1459 = vst.msk [vmem:[%s5 + $0x28] sm:$0xff] %vm85, %v1397
  %1460 = vst [vmem:[%s5 + $0x30] sm:$0xff] %v1398
  %1461 = vst.msk [vmem:[%s5 + $0x38] sm:$0xff] %vm85, %v1399
  %1462 = vst [vmem:[%s5 + $0x40] sm:$0xff] %v1400
  %1463 = vst.msk [vmem:[%s5 + $0x48] sm:$0xff] %vm85, %v1401
  %1464 = vst [vmem:[%s5 + $0x50] sm:$0xff] %v1402
  %1465 = vst.msk [vmem:[%s5 + $0x58] sm:$0xff] %vm85, %v1403
  %1466 = vst [vmem:[%s5 + $0x60] sm:$0xff] %v1404
  %1467 = vst.msk [vmem:[%s5 + $0x68] sm:$0xff] %vm85, %v1405
  %1468 = vst [vmem:[%s5 + $0x70] sm:$0xff] %v1406
  %1469 = vst.msk [vmem:[%s5 + $0x78] sm:$0xff] %vm85, %v1407
  %1470 = vst [vmem:[%s5 + $0x80] sm:$0xff] %v1408
  %1471 = vst.msk [vmem:[%s5 + $0x88] sm:$0xff] %vm85, %v1409
  %1472 = vst [vmem:[%s5 + $0x90] sm:$0xff] %v1410
  %1473 = vst.msk [vmem:[%s5 + $0x98] sm:$0xff] %vm85, %v1411
  %1474 = vst [vmem:[%s5 + $0xa0] sm:$0xff] %v1412
  %1475 = vst.msk [vmem:[%s5 + $0xa8] sm:$0xff] %vm85, %v1413
  %1476 = vst [vmem:[%s5 + $0xb0] sm:$0xff] %v1414
  %1477 = vst.msk [vmem:[%s5 + $0xb8] sm:$0xff] %vm85, %v1415
  %1478 = vst [vmem:[%s5 + $0xc0] sm:$0xff] %v1416
  %1479 = vst.msk [vmem:[%s5 + $0xc8] sm:$0xff] %vm85, %v1417
  %1480 = vst [vmem:[%s5 + $0xd0] sm:$0xff] %v1418
  %1481 = vst.msk [vmem:[%s5 + $0xd8] sm:$0xff] %vm85, %v1419
  %1482 = vst [vmem:[%s5 + $0xe0] sm:$0xff] %v1420
  %1483 = vst.msk [vmem:[%s5 + $0xe8] sm:$0xff] %vm85, %v1421
  %1484 = vst [vmem:[%s5 + $0xf0] sm:$0xff] %v1422
  %1485 = vst.msk [vmem:[%s5 + $0xf8] sm:$0xff] %vm85, %v1423
  %1486 = vst [vmem:[%s5 + $0x100] sm:$0xff] %v1424
  %1487 = vst.msk [vmem:[%s5 + $0x108] sm:$0xff] %vm85, %v1425
  %1488 = vst [vmem:[%s5 + $0x110] sm:$0xff] %v1426
  %1489 = vst.msk [vmem:[%s5 + $0x118] sm:$0xff] %vm85, %v1427
  %1490 = vst [vmem:[%s5 + $0x120] sm:$0xff] %v1428
  %1491 = vst.msk [vmem:[%s5 + $0x128] sm:$0xff] %vm85, %v1429
  %1492 = vst [vmem:[%s5 + $0x130] sm:$0xff] %v1430
  %1493 = vst.msk [vmem:[%s5 + $0x138] sm:$0xff] %vm85, %v1431
  %1494 = vst [vmem:[%s5 + $0x140] sm:$0xff] %v1432
  %1495 = vst.msk [vmem:[%s5 + $0x148] sm:$0xff] %vm85, %v1433
  %1496 = vst [vmem:[%s5 + $0x150] sm:$0xff] %v1434
  %1497 = vst.msk [vmem:[%s5 + $0x158] sm:$0xff] %vm85, %v1435
  %1498 = vst [vmem:[%s5 + $0x160] sm:$0xff] %v1436
  %1499 = vst.msk [vmem:[%s5 + $0x168] sm:$0xff] %vm85, %v1437
  %1500 = vst [vmem:[%s5 + $0x170] sm:$0xff] %v1438
  %1501 = vst.msk [vmem:[%s5 + $0x178] sm:$0xff] %vm85, %v1439
  %1502 = vst [vmem:[%s5 + $0x180] sm:$0xff] %v1440
  %1503 = vst.msk [vmem:[%s5 + $0x188] sm:$0xff] %vm85, %v1441
  %1504 = vst [vmem:[%s5 + $0x190] sm:$0xff] %v1442
  %1505 = vst.msk [vmem:[%s5 + $0x198] sm:$0xff] %vm85, %v1443
  %1506 = vst [vmem:[%s5 + $0x1a0] sm:$0xff] %v1444
  %1507 = vst.msk [vmem:[%s5 + $0x1a8] sm:$0xff] %vm85, %v1445
  %1508 = vst [vmem:[%s5 + $0x1b0] sm:$0xff] %v1446
  %1509 = vst.msk [vmem:[%s5 + $0x1b8] sm:$0xff] %vm85, %v1447
  %1510 = vst [vmem:[%s5 + $0x1c0] sm:$0xff] %v1448
  %1511 = vst.msk [vmem:[%s5 + $0x1c8] sm:$0xff] %vm85, %v1449
  %1512 = vst [vmem:[%s5 + $0x1d0] sm:$0xff] %v1450
  %1513 = vst.msk [vmem:[%s5 + $0x1d8] sm:$0xff] %vm85, %v1451
  %1514 = vst [vmem:[%s5 + $0x1e0] sm:$0xf] %v1452
  %1515 = vst.msk [vmem:[%s5 + $0x1e8] sm:$0xf] %vm208, %v1453
  %v1516 = vmul.f32 %v493, 1.0051283
  %v1517 = vmul.f32 %v494, 1.0051283
  %v1518 = vmul.f32 %v495, 1.0051283
  %v1519 = vmul.f32 %v496, 1.0051283
  %v1520 = vmul.f32 %v497, 1.0051283
  %v1521 = vmul.f32 %v498, 1.0051283
  %v1522 = vmul.f32 %v499, 1.0051283
  %v1523 = vmul.f32 %v500, 1.0051283
  %v1524 = vmul.f32 %v501, 1.0051283
  %v1525 = vmul.f32 %v502, 1.0051283
  %v1526 = vmul.f32 %v503, 1.0051283
  %v1527 = vmul.f32 %v504, 1.0051283
  %v1528 = vmul.f32 %v505, 1.0051283
  %v1529 = vmul.f32 %v506, 1.0051283
  %v1530 = vmul.f32 %v507, 1.0051283
  %v1531 = vmul.f32 %v508, 1.0051283
  %v1532 = vmul.f32 %v509, 1.0051283
  %v1533 = vmul.f32 %v510, 1.0051283
  %v1534 = vmul.f32 %v511, 1.0051283
  %v1535 = vmul.f32 %v512, 1.0051283
  %v1536 = vmul.f32 %v513, 1.0051283
  %v1537 = vmul.f32 %v514, 1.0051283
  %v1538 = vmul.f32 %v515, 1.0051283
  %v1539 = vmul.f32 %v516, 1.0051283
  %v1540 = vmul.f32 %v517, 1.0051283
  %v1541 = vmul.f32 %v518, 1.0051283
  %v1542 = vmul.f32 %v519, 1.0051283
  %v1543 = vmul.f32 %v520, 1.0051283
  %v1544 = vmul.f32 %v521, 1.0051283
  %v1545 = vmul.f32 %v522, 1.0051283
  %v1546 = vmul.f32 %v523, 1.0051283
  %v1547 = vld [vmem:[%s3] sm:$0xff]
  %v1548 = vld [vmem:[%s3 + $0x8] sm:$0xff]
  %v1549 = vld [vmem:[%s3 + $0x10] sm:$0xff]
  %v1550 = vld [vmem:[%s3 + $0x18] sm:$0xff]
  %v1551 = vld [vmem:[%s3 + $0x20] sm:$0xff]
  %v1552 = vld [vmem:[%s3 + $0x28] sm:$0xff]
  %v1553 = vld [vmem:[%s3 + $0x30] sm:$0xff]
  %v1554 = vld [vmem:[%s3 + $0x38] sm:$0xff]
  %v1555 = vld [vmem:[%s3 + $0x40] sm:$0xff]
  %v1556 = vld [vmem:[%s3 + $0x48] sm:$0xff]
  %v1557 = vld [vmem:[%s3 + $0x50] sm:$0xff]
  %v1558 = vld [vmem:[%s3 + $0x58] sm:$0xff]
  %v1559 = vld [vmem:[%s3 + $0x60] sm:$0xff]
  %v1560 = vld [vmem:[%s3 + $0x68] sm:$0xff]
  %v1561 = vld [vmem:[%s3 + $0x70] sm:$0xff]
  %v1562 = vld [vmem:[%s3 + $0x78] sm:$0xff]
  %v1563 = vld [vmem:[%s3 + $0x80] sm:$0xff]
  %v1564 = vld [vmem:[%s3 + $0x88] sm:$0xff]
  %v1565 = vld [vmem:[%s3 + $0x90] sm:$0xff]
  %v1566 = vld [vmem:[%s3 + $0x98] sm:$0xff]
  %v1567 = vld [vmem:[%s3 + $0xa0] sm:$0xff]
  %v1568 = vld [vmem:[%s3 + $0xa8] sm:$0xff]
  %v1569 = vld [vmem:[%s3 + $0xb0] sm:$0xff]
  %v1570 = vld [vmem:[%s3 + $0xb8] sm:$0xff]
  %v1571 = vld [vmem:[%s3 + $0xc0] sm:$0xff]
  %v1572 = vld [vmem:[%s3 + $0xc8] sm:$0xff]
  %v1573 = vld [vmem:[%s3 + $0xd0] sm:$0xff]
  %v1574 = vld [vmem:[%s3 + $0xd8] sm:$0xff]
  %v1575 = vld [vmem:[%s3 + $0xe0] sm:$0xff]
  %v1576 = vld [vmem:[%s3 + $0xe8] sm:$0xff]
  %v1577 = vld [vmem:[%s3 + $0xf0] sm:$0xf]
  %v1578 = vmul.f32 %v1547, 0.9
  %v1579 = vmul.f32 %v1548, 0.9
  %v1580 = vmul.f32 %v1549, 0.9
  %v1581 = vmul.f32 %v1550, 0.9
  %v1582 = vmul.f32 %v1551, 0.9
  %v1583 = vmul.f32 %v1552, 0.9
  %v1584 = vmul.f32 %v1553, 0.9
  %v1585 = vmul.f32 %v1554, 0.9
  %v1586 = vmul.f32 %v1555, 0.9
  %v1587 = vmul.f32 %v1556, 0.9
  %v1588 = vmul.f32 %v1557, 0.9
  %v1589 = vmul.f32 %v1558, 0.9
  %v1590 = vmul.f32 %v1559, 0.9
  %v1591 = vmul.f32 %v1560, 0.9
  %v1592 = vmul.f32 %v1561, 0.9
  %v1593 = vmul.f32 %v1562, 0.9
  %v1594 = vmul.f32 %v1563, 0.9
  %v1595 = vmul.f32 %v1564, 0.9
  %v1596 = vmul.f32 %v1565, 0.9
  %v1597 = vmul.f32 %v1566, 0.9
  %v1598 = vmul.f32 %v1567, 0.9
  %v1599 = vmul.f32 %v1568, 0.9
  %v1600 = vmul.f32 %v1569, 0.9
  %v1601 = vmul.f32 %v1570, 0.9
  %v1602 = vmul.f32 %v1571, 0.9
  %v1603 = vmul.f32 %v1572, 0.9
  %v1604 = vmul.f32 %v1573, 0.9
  %v1605 = vmul.f32 %v1574, 0.9
  %v1606 = vmul.f32 %v1575, 0.9
  %v1607 = vmul.f32 %v1576, 0.9
  %v1608 = vmul.f32 %v1577, 0.9
  %v1609 = vmul.f32 %v213, 0.1
  %v1610 = vmul.f32 %v214, 0.1
  %v1611 = vmul.f32 %v215, 0.1
  %v1612 = vmul.f32 %v216, 0.1
  %v1613 = vmul.f32 %v217, 0.1
  %v1614 = vmul.f32 %v218, 0.1
  %v1615 = vmul.f32 %v219, 0.1
  %v1616 = vmul.f32 %v220, 0.1
  %v1617 = vmul.f32 %v221, 0.1
  %v1618 = vmul.f32 %v222, 0.1
  %v1619 = vmul.f32 %v223, 0.1
  %v1620 = vmul.f32 %v224, 0.1
  %v1621 = vmul.f32 %v225, 0.1
  %v1622 = vmul.f32 %v226, 0.1
  %v1623 = vmul.f32 %v227, 0.1
  %v1624 = vmul.f32 %v228, 0.1
  %v1625 = vmul.f32 %v229, 0.1
  %v1626 = vmul.f32 %v230, 0.1
  %v1627 = vmul.f32 %v231, 0.1
  %v1628 = vmul.f32 %v232, 0.1
  %v1629 = vmul.f32 %v233, 0.1
  %v1630 = vmul.f32 %v234, 0.1
  %v1631 = vmul.f32 %v235, 0.1
  %v1632 = vmul.f32 %v236, 0.1
  %v1633 = vmul.f32 %v237, 0.1
  %v1634 = vmul.f32 %v238, 0.1
  %v1635 = vmul.f32 %v239, 0.1
  %v1636 = vmul.f32 %v240, 0.1
  %v1637 = vmul.f32 %v241, 0.1
  %v1638 = vmul.f32 %v242, 0.1
  %v1639 = vmul.f32 %v243, 0.1
  %v1640 = vadd.f32 %v1578, %v1609
  %v1641 = vadd.f32 %v1579, %v1610
  %v1642 = vadd.f32 %v1580, %v1611
  %v1643 = vadd.f32 %v1581, %v1612
  %v1644 = vadd.f32 %v1582, %v1613
  %v1645 = vadd.f32 %v1583, %v1614
  %v1646 = vadd.f32 %v1584, %v1615
  %v1647 = vadd.f32 %v1585, %v1616
  %v1648 = vadd.f32 %v1586, %v1617
  %v1649 = vadd.f32 %v1587, %v1618
  %v1650 = vadd.f32 %v1588, %v1619
  %v1651 = vadd.f32 %v1589, %v1620
  %v1652 = vadd.f32 %v1590, %v1621
  %v1653 = vadd.f32 %v1591, %v1622
  %v1654 = vadd.f32 %v1592, %v1623
  %v1655 = vadd.f32 %v1593, %v1624
  %v1656 = vadd.f32 %v1594, %v1625
  %v1657 = vadd.f32 %v1595, %v1626
  %v1658 = vadd.f32 %v1596, %v1627
  %v1659 = vadd.f32 %v1597, %v1628
  %v1660 = vadd.f32 %v1598, %v1629
  %v1661 = vadd.f32 %v1599, %v1630
  %v1662 = vadd.f32 %v1600, %v1631
  %v1663 = vadd.f32 %v1601, %v1632
  %v1664 = vadd.f32 %v1602, %v1633
  %v1665 = vadd.f32 %v1603, %v1634
  %v1666 = vadd.f32 %v1604, %v1635
  %v1667 = vadd.f32 %v1605, %v1636
  %v1668 = vadd.f32 %v1606, %v1637
  %v1669 = vadd.f32 %v1607, %v1638
  %v1670 = vadd.f32 %v1608, %v1639
  %vm1671 = vcmask 7168
  %1672 = vst.msk [vmem:[%s6] sm:$0xff] %vm1671, %v1640
  %1673 = vst.msk [vmem:[%s6 + $0x8] sm:$0xff] %vm1671, %v1641
  %1674 = vst.msk [vmem:[%s6 + $0x10] sm:$0xff] %vm1671, %v1642
  %1675 = vst.msk [vmem:[%s6 + $0x18] sm:$0xff] %vm1671, %v1643
  %1676 = vst.msk [vmem:[%s6 + $0x20] sm:$0xff] %vm1671, %v1644
  %1677 = vst.msk [vmem:[%s6 + $0x28] sm:$0xff] %vm1671, %v1645
  %1678 = vst.msk [vmem:[%s6 + $0x30] sm:$0xff] %vm1671, %v1646
  %1679 = vst.msk [vmem:[%s6 + $0x38] sm:$0xff] %vm1671, %v1647
  %1680 = vst.msk [vmem:[%s6 + $0x40] sm:$0xff] %vm1671, %v1648
  %1681 = vst.msk [vmem:[%s6 + $0x48] sm:$0xff] %vm1671, %v1649
  %1682 = vst.msk [vmem:[%s6 + $0x50] sm:$0xff] %vm1671, %v1650
  %1683 = vst.msk [vmem:[%s6 + $0x58] sm:$0xff] %vm1671, %v1651
  %1684 = vst.msk [vmem:[%s6 + $0x60] sm:$0xff] %vm1671, %v1652
  %1685 = vst.msk [vmem:[%s6 + $0x68] sm:$0xff] %vm1671, %v1653
  %1686 = vst.msk [vmem:[%s6 + $0x70] sm:$0xff] %vm1671, %v1654
  %1687 = vst.msk [vmem:[%s6 + $0x78] sm:$0xff] %vm1671, %v1655
  %1688 = vst.msk [vmem:[%s6 + $0x80] sm:$0xff] %vm1671, %v1656
  %1689 = vst.msk [vmem:[%s6 + $0x88] sm:$0xff] %vm1671, %v1657
  %1690 = vst.msk [vmem:[%s6 + $0x90] sm:$0xff] %vm1671, %v1658
  %1691 = vst.msk [vmem:[%s6 + $0x98] sm:$0xff] %vm1671, %v1659
  %1692 = vst.msk [vmem:[%s6 + $0xa0] sm:$0xff] %vm1671, %v1660
  %1693 = vst.msk [vmem:[%s6 + $0xa8] sm:$0xff] %vm1671, %v1661
  %1694 = vst.msk [vmem:[%s6 + $0xb0] sm:$0xff] %vm1671, %v1662
  %1695 = vst.msk [vmem:[%s6 + $0xb8] sm:$0xff] %vm1671, %v1663
  %1696 = vst.msk [vmem:[%s6 + $0xc0] sm:$0xff] %vm1671, %v1664
  %1697 = vst.msk [vmem:[%s6 + $0xc8] sm:$0xff] %vm1671, %v1665
  %1698 = vst.msk [vmem:[%s6 + $0xd0] sm:$0xff] %vm1671, %v1666
  %1699 = vst.msk [vmem:[%s6 + $0xd8] sm:$0xff] %vm1671, %v1667
  %1700 = vst.msk [vmem:[%s6 + $0xe0] sm:$0xff] %vm1671, %v1668
  %1701 = vst.msk [vmem:[%s6 + $0xe8] sm:$0xff] %vm1671, %v1669
  %vm1702 = vcmask 3072
  %1703 = vst.msk [vmem:[%s6 + $0xf0] sm:$0xf] %vm1702, %v1670
  %v1704 = vld [vmem:[%s4] sm:$0xff]
  %v1705 = vld [vmem:[%s4 + $0x8] sm:$0xff]
  %v1706 = vld [vmem:[%s4 + $0x10] sm:$0xff]
  %v1707 = vld [vmem:[%s4 + $0x18] sm:$0xff]
  %v1708 = vld [vmem:[%s4 + $0x20] sm:$0xff]
  %v1709 = vld [vmem:[%s4 + $0x28] sm:$0xff]
  %v1710 = vld [vmem:[%s4 + $0x30] sm:$0xff]
  %v1711 = vld [vmem:[%s4 + $0x38] sm:$0xff]
  %v1712 = vld [vmem:[%s4 + $0x40] sm:$0xff]
  %v1713 = vld [vmem:[%s4 + $0x48] sm:$0xff]
  %v1714 = vld [vmem:[%s4 + $0x50] sm:$0xff]
  %v1715 = vld [vmem:[%s4 + $0x58] sm:$0xff]
  %v1716 = vld [vmem:[%s4 + $0x60] sm:$0xff]
  %v1717 = vld [vmem:[%s4 + $0x68] sm:$0xff]
  %v1718 = vld [vmem:[%s4 + $0x70] sm:$0xff]
  %v1719 = vld [vmem:[%s4 + $0x78] sm:$0xff]
  %v1720 = vld [vmem:[%s4 + $0x80] sm:$0xff]
  %v1721 = vld [vmem:[%s4 + $0x88] sm:$0xff]
  %v1722 = vld [vmem:[%s4 + $0x90] sm:$0xff]
  %v1723 = vld [vmem:[%s4 + $0x98] sm:$0xff]
  %v1724 = vld [vmem:[%s4 + $0xa0] sm:$0xff]
  %v1725 = vld [vmem:[%s4 + $0xa8] sm:$0xff]
  %v1726 = vld [vmem:[%s4 + $0xb0] sm:$0xff]
  %v1727 = vld [vmem:[%s4 + $0xb8] sm:$0xff]
  %v1728 = vld [vmem:[%s4 + $0xc0] sm:$0xff]
  %v1729 = vld [vmem:[%s4 + $0xc8] sm:$0xff]
  %v1730 = vld [vmem:[%s4 + $0xd0] sm:$0xff]
  %v1731 = vld [vmem:[%s4 + $0xd8] sm:$0xff]
  %v1732 = vld [vmem:[%s4 + $0xe0] sm:$0xff]
  %v1733 = vld [vmem:[%s4 + $0xe8] sm:$0xff]
  %v1734 = vld [vmem:[%s4 + $0xf0] sm:$0xf]
  %v1735 = vmul.f32 %v1704, 0.9
  %v1736 = vmul.f32 %v1705, 0.9
  %v1737 = vmul.f32 %v1706, 0.9
  %v1738 = vmul.f32 %v1707, 0.9
  %v1739 = vmul.f32 %v1708, 0.9
  %v1740 = vmul.f32 %v1709, 0.9
  %v1741 = vmul.f32 %v1710, 0.9
  %v1742 = vmul.f32 %v1711, 0.9
  %v1743 = vmul.f32 %v1712, 0.9
  %v1744 = vmul.f32 %v1713, 0.9
  %v1745 = vmul.f32 %v1714, 0.9
  %v1746 = vmul.f32 %v1715, 0.9
  %v1747 = vmul.f32 %v1716, 0.9
  %v1748 = vmul.f32 %v1717, 0.9
  %v1749 = vmul.f32 %v1718, 0.9
  %v1750 = vmul.f32 %v1719, 0.9
  %v1751 = vmul.f32 %v1720, 0.9
  %v1752 = vmul.f32 %v1721, 0.9
  %v1753 = vmul.f32 %v1722, 0.9
  %v1754 = vmul.f32 %v1723, 0.9
  %v1755 = vmul.f32 %v1724, 0.9
  %v1756 = vmul.f32 %v1725, 0.9
  %v1757 = vmul.f32 %v1726, 0.9
  %v1758 = vmul.f32 %v1727, 0.9
  %v1759 = vmul.f32 %v1728, 0.9
  %v1760 = vmul.f32 %v1729, 0.9
  %v1761 = vmul.f32 %v1730, 0.9
  %v1762 = vmul.f32 %v1731, 0.9
  %v1763 = vmul.f32 %v1732, 0.9
  %v1764 = vmul.f32 %v1733, 0.9
  %v1765 = vmul.f32 %v1734, 0.9
  %v1766 = vmul.f32 %v1516, 0.1
  %v1767 = vmul.f32 %v1517, 0.1
  %v1768 = vmul.f32 %v1518, 0.1
  %v1769 = vmul.f32 %v1519, 0.1
  %v1770 = vmul.f32 %v1520, 0.1
  %v1771 = vmul.f32 %v1521, 0.1
  %v1772 = vmul.f32 %v1522, 0.1
  %v1773 = vmul.f32 %v1523, 0.1
  %v1774 = vmul.f32 %v1524, 0.1
  %v1775 = vmul.f32 %v1525, 0.1
  %v1776 = vmul.f32 %v1526, 0.1
  %v1777 = vmul.f32 %v1527, 0.1
  %v1778 = vmul.f32 %v1528, 0.1
  %v1779 = vmul.f32 %v1529, 0.1
  %v1780 = vmul.f32 %v1530, 0.1
  %v1781 = vmul.f32 %v1531, 0.1
  %v1782 = vmul.f32 %v1532, 0.1
  %v1783 = vmul.f32 %v1533, 0.1
  %v1784 = vmul.f32 %v1534, 0.1
  %v1785 = vmul.f32 %v1535, 0.1
  %v1786 = vmul.f32 %v1536, 0.1
  %v1787 = vmul.f32 %v1537, 0.1
  %v1788 = vmul.f32 %v1538, 0.1
  %v1789 = vmul.f32 %v1539, 0.1
  %v1790 = vmul.f32 %v1540, 0.1
  %v1791 = vmul.f32 %v1541, 0.1
  %v1792 = vmul.f32 %v1542, 0.1
  %v1793 = vmul.f32 %v1543, 0.1
  %v1794 = vmul.f32 %v1544, 0.1
  %v1795 = vmul.f32 %v1545, 0.1
  %v1796 = vmul.f32 %v1546, 0.1
  %v1797 = vadd.f32 %v1735, %v1766
  %v1798 = vadd.f32 %v1736, %v1767
  %v1799 = vadd.f32 %v1737, %v1768
  %v1800 = vadd.f32 %v1738, %v1769
  %v1801 = vadd.f32 %v1739, %v1770
  %v1802 = vadd.f32 %v1740, %v1771
  %v1803 = vadd.f32 %v1741, %v1772
  %v1804 = vadd.f32 %v1742, %v1773
  %v1805 = vadd.f32 %v1743, %v1774
  %v1806 = vadd.f32 %v1744, %v1775
  %v1807 = vadd.f32 %v1745, %v1776
  %v1808 = vadd.f32 %v1746, %v1777
  %v1809 = vadd.f32 %v1747, %v1778
  %v1810 = vadd.f32 %v1748, %v1779
  %v1811 = vadd.f32 %v1749, %v1780
  %v1812 = vadd.f32 %v1750, %v1781
  %v1813 = vadd.f32 %v1751, %v1782
  %v1814 = vadd.f32 %v1752, %v1783
  %v1815 = vadd.f32 %v1753, %v1784
  %v1816 = vadd.f32 %v1754, %v1785
  %v1817 = vadd.f32 %v1755, %v1786
  %v1818 = vadd.f32 %v1756, %v1787
  %v1819 = vadd.f32 %v1757, %v1788
  %v1820 = vadd.f32 %v1758, %v1789
  %v1821 = vadd.f32 %v1759, %v1790
  %v1822 = vadd.f32 %v1760, %v1791
  %v1823 = vadd.f32 %v1761, %v1792
  %v1824 = vadd.f32 %v1762, %v1793
  %v1825 = vadd.f32 %v1763, %v1794
  %v1826 = vadd.f32 %v1764, %v1795
  %v1827 = vadd.f32 %v1765, %v1796
  %1828 = vst.msk [vmem:[%s7] sm:$0xff] %vm1671, %v1797
  %1829 = vst.msk [vmem:[%s7 + $0x8] sm:$0xff] %vm1671, %v1798
  %1830 = vst.msk [vmem:[%s7 + $0x10] sm:$0xff] %vm1671, %v1799
  %1831 = vst.msk [vmem:[%s7 + $0x18] sm:$0xff] %vm1671, %v1800
  %1832 = vst.msk [vmem:[%s7 + $0x20] sm:$0xff] %vm1671, %v1801
  %1833 = vst.msk [vmem:[%s7 + $0x28] sm:$0xff] %vm1671, %v1802
  %1834 = vst.msk [vmem:[%s7 + $0x30] sm:$0xff] %vm1671, %v1803
  %1835 = vst.msk [vmem:[%s7 + $0x38] sm:$0xff] %vm1671, %v1804
  %1836 = vst.msk [vmem:[%s7 + $0x40] sm:$0xff] %vm1671, %v1805
  %1837 = vst.msk [vmem:[%s7 + $0x48] sm:$0xff] %vm1671, %v1806
  %1838 = vst.msk [vmem:[%s7 + $0x50] sm:$0xff] %vm1671, %v1807
  %1839 = vst.msk [vmem:[%s7 + $0x58] sm:$0xff] %vm1671, %v1808
  %1840 = vst.msk [vmem:[%s7 + $0x60] sm:$0xff] %vm1671, %v1809
  %1841 = vst.msk [vmem:[%s7 + $0x68] sm:$0xff] %vm1671, %v1810
  %1842 = vst.msk [vmem:[%s7 + $0x70] sm:$0xff] %vm1671, %v1811
  %1843 = vst.msk [vmem:[%s7 + $0x78] sm:$0xff] %vm1671, %v1812
  %1844 = vst.msk [vmem:[%s7 + $0x80] sm:$0xff] %vm1671, %v1813
  %1845 = vst.msk [vmem:[%s7 + $0x88] sm:$0xff] %vm1671, %v1814
  %1846 = vst.msk [vmem:[%s7 + $0x90] sm:$0xff] %vm1671, %v1815
  %1847 = vst.msk [vmem:[%s7 + $0x98] sm:$0xff] %vm1671, %v1816
  %1848 = vst.msk [vmem:[%s7 + $0xa0] sm:$0xff] %vm1671, %v1817
  %1849 = vst.msk [vmem:[%s7 + $0xa8] sm:$0xff] %vm1671, %v1818
  %1850 = vst.msk [vmem:[%s7 + $0xb0] sm:$0xff] %vm1671, %v1819
  %1851 = vst.msk [vmem:[%s7 + $0xb8] sm:$0xff] %vm1671, %v1820
  %1852 = vst.msk [vmem:[%s7 + $0xc0] sm:$0xff] %vm1671, %v1821
  %1853 = vst.msk [vmem:[%s7 + $0xc8] sm:$0xff] %vm1671, %v1822
  %1854 = vst.msk [vmem:[%s7 + $0xd0] sm:$0xff] %vm1671, %v1823
  %1855 = vst.msk [vmem:[%s7 + $0xd8] sm:$0xff] %vm1671, %v1824
  %1856 = vst.msk [vmem:[%s7 + $0xe0] sm:$0xff] %vm1671, %v1825
  %1857 = vst.msk [vmem:[%s7 + $0xe8] sm:$0xff] %vm1671, %v1826
  %1858 = vst.msk [vmem:[%s7 + $0xf0] sm:$0xf] %vm1702, %v1827
  // Predicated region
  $region22: #{tpu_custom_call.1} parent=0 // pred_check
    _
  $region23: #{tpu_custom_call.1} parent=0 // pred_check_branch
    %1860 = sbr.rel (0) target = $region25
  $region24: #{tpu_custom_call.1} parent=0 // pred_region
    _
  $region25: #{tpu_custom_call.1} parent=0 // pred_fallthru
    _
  // Predicated region
  $region26: #{tpu_custom_call.1} parent=0 // pred_check
    _
  $region27: #{tpu_custom_call.1} parent=0 // pred_check_branch
    %1862 = sbr.rel (0) target = $region29
  $region28: #{tpu_custom_call.1} parent=0 // pred_region
    _
  $region29: #{tpu_custom_call.1} parent=0 // pred_fallthru
    _
  // Predicated region
  $region30: #{tpu_custom_call.1} parent=0 // pred_check
    _
  $region31: #{tpu_custom_call.1} parent=0 // pred_check_branch
    %1864 = sbr.rel (0) target = $region33
  $region32: #{tpu_custom_call.1} parent=0 // pred_region
    _
  $region33: #{tpu_custom_call.1} parent=0 // pred_fallthru
    _
  // Predicated region
  $region34: #{tpu_custom_call.1} parent=0 // pred_check
    _
  $region35: #{tpu_custom_call.1} parent=0 // pred_check_branch
    %1866 = sbr.rel (0) target = $region37
  $region36: #{tpu_custom_call.1} parent=0 // pred_region
    _
  $region37: #{tpu_custom_call.1} parent=0 // pred_fallthru
    _
  // Predicated region
  $region38: #{tpu_custom_call.1} parent=0 // pred_check
    _
  $region39: #{tpu_custom_call.1} parent=0 // pred_check_branch
    %1868 = sbr.rel (0) target = $region41
  $region40: #{tpu_custom_call.1} parent=0 // pred_region
    _
  $region41: #{tpu_custom_call.1} parent=0 // pred_fallthru
    _
  // Predicated region
  $region42: #{tpu_custom_call.1} parent=0 // pred_check
    _
  $region43: #{tpu_custom_call.1} parent=0 // pred_check_branch
    %1870 = sbr.rel (0) target = $region45
  $region44: #{tpu_custom_call.1} parent=0 // pred_region
    _
  $region45: #{tpu_custom_call.1} parent=0 // pred_fallthru
    _

</llo_original>
